<compile_context>
chip_gen: v7x
topology: tpu7x:2x2x1
jax: 0.10.0
libtpu: 0.0.40
codegen_flags: <defaults>
</compile_context>

<pallas_src>
import functools

import jax
import jax.numpy as jnp
from jax import lax
from jax.experimental import pallas as pl
from jax.experimental.pallas import tpu as pltpu

# ---- module hyper-parameters (baked in as Python constants) -----------------
QUERY_DIM = 32                      # query_dim == channel count of NCHW input
HEADS = 4
DIM_HEAD = 8                        # == one f32 sublane tile
INNER_DIM = HEADS * DIM_HEAD        # 32
SCALE = float(DIM_HEAD) ** -0.5     # scale_qk=True
RESCALE_OUTPUT_FACTOR = 1.0
RESIDUAL_CONNECTION = False


def _attention_kernel(x_ref, wqkv_ref, wo_ref, bo_ref, o_ref,
                      q_scr, k_scr, v_scr,
                      *, s_actual, tq, hoist_qkv, softmax_dtype):
    """One grid step = one batch element x one query-token tile.

    All tiles are (channels, tokens): channels on sublanes, tokens on lanes.
    x_ref:    (1, C, S_pad)  input (full padded sequence for this batch elem)
    wqkv_ref: (3*INNER, C)   bf16, q rows pre-scaled by 1/sqrt(dh)
    wo_ref:   (C, INNER)     bf16
    bo_ref:   (C, 1)         f32
    o_ref:    (1, C, TQ)
    q/k/v_scr:(INNER, S_pad) f32 resident projections (recomputed at qi == 0)
    """
    s_pad = x_ref.shape[-1]

    def compute_qkv():
        xb = x_ref[0].astype(jnp.bfloat16)                              # (C, S_pad)
        qkv = jnp.dot(wqkv_ref[...], xb,
                      preferred_element_type=jnp.float32)               # (3*INNER, S_pad)
        q_scr[...] = qkv[:INNER_DIM]
        k_scr[...] = qkv[INNER_DIM:2 * INNER_DIM]
        v_scr[...] = qkv[2 * INNER_DIM:]

    if hoist_qkv:
        # QKV projection once per batch element (query-tile axis is "arbitrary").
        pl.when(pl.program_id(1) == 0)(compute_qkv)
    else:
        compute_qkv()

    # Query tile = lane slice of the resident Q scratch (no duplicate input).
    start = pl.multiple_of(pl.program_id(1) * tq, 128)
    q_tile = q_scr[:, pl.ds(start, tq)]                                 # (INNER, TQ) f32

    # Padded key columns (x padded with zeros) must be excluded from softmax.
    if s_actual != s_pad:
        kidx = lax.broadcasted_iota(jnp.int32, (s_pad, 1), 0)
        mask_bias = jnp.where(kidx < s_actual, 0.0, -1e30).astype(jnp.float32)
    else:
        mask_bias = None

    head_outs = []
    for h in range(HEADS):               # static unroll; sublane-aligned slices
        lo = h * DIM_HEAD
        hi = lo + DIM_HEAD
        qh = q_tile[lo:hi, :].astype(jnp.bfloat16)                      # (dh, TQ)
        kh = k_scr[lo:hi, :].astype(jnp.bfloat16)                       # (dh, S_pad)
        vh = v_scr[lo:hi, :].astype(jnp.bfloat16)                       # (dh, S_pad)

        # Scores oriented (key, query): contraction over dh with a
        # lhs-transposed dot_general -- no materialized kh.T; the softmax
        # statistics come out as (1, TQ) which broadcasts over (dh, TQ).
        s = lax.dot_general(kh, qh, (((0,), (0,)), ((), ())),
                            preferred_element_type=jnp.float32)         # (S_pad, TQ)
        if mask_bias is not None:
            s = s + mask_bias
        m = jnp.max(s, axis=0, keepdims=True)                           # (1, TQ) f32
        p = jnp.exp((s - m).astype(softmax_dtype))                      # (S_pad, TQ)
        l = jnp.sum(p, axis=0, keepdims=True, dtype=jnp.float32)        # (1, TQ) f32
        p_mm = p if softmax_dtype == jnp.bfloat16 else p.astype(jnp.bfloat16)
        # Deferred normalization: PV on unnormalized p, then one EUP
        # reciprocal + a (dh, TQ) multiply instead of (S, TQ) divides.
        oh = jnp.dot(vh, p_mm, preferred_element_type=jnp.float32)      # (dh, TQ)
        head_outs.append(oh * pl.reciprocal(l, approx=True))

    attn = jnp.concatenate(head_outs, axis=0).astype(jnp.bfloat16)      # (INNER, TQ)

    # Output projection (to_out[0], with bias); to_out[1] is Dropout(0) -> id.
    out = jnp.dot(wo_ref[...], attn,
                  preferred_element_type=jnp.float32) + bo_ref[...]     # (C, TQ)
    if RESIDUAL_CONNECTION:
        out = out + x_ref[0, :, pl.ds(start, tq)]
    if RESCALE_OUTPUT_FACTOR != 1.0:
        out = out * (1.0 / RESCALE_OUTPUT_FACTOR)
    o_ref[0] = out.astype(o_ref.dtype)


# ---- host-side helpers -------------------------------------------------------
def _round_up(x, m):
    return ((x + m - 1) // m) * m


def _bf16_eup_supported():
    """bf16 VPU/EUP exists on v6e and newer; v5e and older run f32 elementwise."""
    try:
        kind = jax.devices()[0].device_kind.lower()
    except Exception:
        return False
    return not any(v in kind for v in ("v2", "v3", "v4", "v5"))


def _vmem_budget_bytes():
    """Never request the full physical VMEM (v7x only has 64 MiB per TC)."""
    try:
        cap = int(pltpu.get_tpu_info().vmem_capacity_bytes)
    except Exception:
        cap = 64 << 20
    return int(min(cap * 3 // 4, 96 << 20))


def _vmem_estimate(c, s_pad, tq, p_bytes):
    f32 = 4
    io = 2 * c * s_pad * f32 + 2 * c * tq * f32           # double-buffered x + out blocks
    weights = 2 * (3 * INNER_DIM * c * 2 + c * INNER_DIM * 2 + c * f32)
    scratch = 3 * INNER_DIM * s_pad * f32                 # resident q/k/v (f32)
    per_head = s_pad * tq * (f32 + p_bytes)               # scores (f32) + exp(p)
    inter = 2 * per_head + (3 * INNER_DIM * s_pad + 2 * INNER_DIM * tq + c * tq) * f32
    return io + weights + scratch + inter + (4 << 20)


def _choose_tq(s_pad, budget, p_bytes):
    """Query-token tile (always a multiple of 128 thanks to padded S)."""
    if s_pad <= 512:
        return s_pad
    for t in (512, 256, 128):
        if s_pad % t == 0 and _vmem_estimate(QUERY_DIM, s_pad, t, p_bytes) <= budget:
            return t
    return 128


def diffusers_attention(x_nchw, params):
    """Forward pass of DiffusersAttention for a 4D NCHW input (self-attention)."""
    B, C, H, W = x_nchw.shape
    assert C == QUERY_DIM
    S = H * W
    S_pad = _round_up(max(S, 128), 128)      # lane-dense stores, 128-aligned tiles

    # NCHW -> (B, C, S): pure reshape (channels on sublanes, tokens on lanes),
    # plus zero padding of the token axis (padded keys masked inside the kernel).
    x = x_nchw.reshape(B, C, S)
    if S_pad != S:
        x = jnp.pad(x, ((0, 0), (0, 0), (0, S_pad - S)))

    softmax_dtype = jnp.bfloat16 if _bf16_eup_supported() else jnp.float32
    p_bytes = 2 if softmax_dtype == jnp.bfloat16 else 4
    budget = _vmem_budget_bytes()
    tq = _choose_tq(S_pad, budget, p_bytes)
    n_q = S_pad // tq

    # Hoist the QKV projection (query axis "arbitrary") only when there are
    # several query tiles AND the batch axis alone can feed both TensorCores.
    hoist = (B >= 2) and (n_q > 1)
    dims = ("parallel", "arbitrary") if hoist else ("parallel", "parallel")

    # Torch nn.Linear weights are (out_features, in_features); with the
    # (channels, tokens) kernel layout that is exactly the layout consumed by
    # the kernel (W @ x). Fold the qk scale into Wq, fuse q/k/v, cast to bf16.
    wqkv = jnp.concatenate(
        [params["wq"] * SCALE, params["wk"], params["wv"]], axis=0
    ).astype(jnp.bfloat16)                                      # (3*INNER, C)
    wo = params["wo"].astype(jnp.bfloat16)                      # (C, INNER)
    bo = params["bo"].reshape(C, 1).astype(jnp.float32)

    kernel = functools.partial(
        _attention_kernel, s_actual=S, tq=tq, hoist_qkv=hoist,
        softmax_dtype=softmax_dtype)

    vmem_limit = int(min(max(_vmem_estimate(C, S_pad, tq, p_bytes), 32 << 20),
                         budget))

    out = pl.pallas_call(
        kernel,
        out_shape=jax.ShapeDtypeStruct((B, C, S_pad), x.dtype),
        grid_spec=pltpu.PrefetchScalarGridSpec(
            num_scalar_prefetch=0,
            grid=(B, n_q),
            in_specs=[
                pl.BlockSpec((1, C, S_pad), lambda b, qi: (b, 0, 0)),       # x
                pl.BlockSpec((3 * INNER_DIM, C), lambda b, qi: (0, 0)),     # Wqkv
                pl.BlockSpec((C, INNER_DIM), lambda b, qi: (0, 0)),         # Wo
                pl.BlockSpec((C, 1), lambda b, qi: (0, 0)),                 # bo
            ],
            out_specs=pl.BlockSpec((1, C, tq), lambda b, qi: (b, 0, qi)),
            scratch_shapes=[
                pltpu.VMEM((INNER_DIM, S_pad), jnp.float32),   # q (resident)
                pltpu.VMEM((INNER_DIM, S_pad), jnp.float32),   # k (resident)
                pltpu.VMEM((INNER_DIM, S_pad), jnp.float32),   # v (resident)
            ],
        ),
        compiler_params=pltpu.CompilerParams(
            dimension_semantics=dims,
            vmem_limit_bytes=vmem_limit,
        ),
    )(x, wqkv, wo, bo)

    if S_pad != S:
        out = out[:, :, :S]
    # (B, C, S) -> NCHW: pure reshape.
    return out.reshape(B, C, H, W)


def reference_forward(x_nchw, params):
    """Pure-JAX reference reproducing AttnProcessor2_0 semantics (f32)."""
    B, C, H, W = x_nchw.shape
    S = H * W
    x = x_nchw.reshape(B, C, S).transpose(0, 2, 1)          # (B, S, C)
    q = x @ params["wq"].T
    k = x @ params["wk"].T
    v = x @ params["wv"].T

    def split_heads(t):                                     # (B, heads, S, dh)
        return t.reshape(B, S, HEADS, DIM_HEAD).transpose(0, 2, 1, 3)

    qh, kh, vh = split_heads(q), split_heads(k), split_heads(v)
    s = jnp.einsum("bhqd,bhkd->bhqk", qh, kh) * SCALE
    p = jax.nn.softmax(s, axis=-1)
    o = jnp.einsum("bhqk,bhkd->bhqd", p, vh)
    o = o.transpose(0, 2, 1, 3).reshape(B, S, INNER_DIM)
    o = o @ params["wo"].T + params["bo"]
    if RESIDUAL_CONNECTION:
        o = o + x
    o = o / RESCALE_OUTPUT_FACTOR
    return o.transpose(0, 2, 1).reshape(B, C, H, W)


if __name__ == "__main__":
    key = jax.random.PRNGKey(0)
    kx, kq, kk, kv, ko, kb = jax.random.split(key, 6)

    B, Hh, Ww = 2, 4, 4
    x = jax.random.normal(kx, (B, QUERY_DIM, Hh, Ww), jnp.float32)

    params = {
        "wq": 0.1 * jax.random.normal(kq, (INNER_DIM, QUERY_DIM), jnp.float32),
        "wk": 0.1 * jax.random.normal(kk, (INNER_DIM, QUERY_DIM), jnp.float32),
        "wv": 0.1 * jax.random.normal(kv, (INNER_DIM, QUERY_DIM), jnp.float32),
        "wo": 0.1 * jax.random.normal(ko, (QUERY_DIM, INNER_DIM), jnp.float32),
        "bo": 0.1 * jax.random.normal(kb, (QUERY_DIM,), jnp.float32),
    }

    out = diffusers_attention(x, params)
    out = jax.block_until_ready(out)

    ref = reference_forward(x, params)
    assert out.shape == x.shape
    # Loosened tolerance: bf16 MXU operands + approximate reciprocal in the
    # deferred softmax normalization (inference-only kernel).
    assert jnp.allclose(out, ref, atol=2e-2, rtol=2e-2), "mismatch vs reference"
    print("KERNEL_OK")
</pallas_src>

<mosaic_0001>
module attributes {stable_mosaic.version = 11 : i64} {
  func.func @_attention_kernel(%arg0: i32, %arg1: i32, %arg2: memref<1x32x128xf32, #tpu.memory_space<vmem>>, %arg3: memref<96x32xbf16, #tpu.memory_space<vmem>>, %arg4: memref<32x32xbf16, #tpu.memory_space<vmem>>, %arg5: memref<32x1xf32, #tpu.memory_space<vmem>>, %arg6: memref<1x32x128xf32, #tpu.memory_space<vmem>>, %arg7: memref<32x128xf32, #tpu.memory_space<vmem>>, %arg8: memref<32x128xf32, #tpu.memory_space<vmem>>, %arg9: memref<32x128xf32, #tpu.memory_space<vmem>>) attributes {dimension_semantics = [#tpu.dimension_semantics<parallel>, #tpu.dimension_semantics<parallel>], iteration_bounds = array<i64: 2, 1>, scalar_prefetch = 0 : i64, scratch_operands = 3 : i64, tpu.core_type = #tpu.core_type<tc>, window_params = [{transform_indices = @transform_0, window_bounds = array<i64: 1, 32, 128>}, {pipeline_mode = #tpu.pipeline_mode<synchronous>, transform_indices = @transform_1, window_bounds = array<i64: 96, 32>}, {pipeline_mode = #tpu.pipeline_mode<synchronous>, transform_indices = @transform_2, window_bounds = array<i64: 32, 32>}, {pipeline_mode = #tpu.pipeline_mode<synchronous>, transform_indices = @transform_3, window_bounds = array<i64: 32, 1>}, {transform_indices = @transform_4, window_bounds = array<i64: 1, 32, 128>}]} {
    %c0 = arith.constant 0 : index
    %c0_0 = arith.constant 0 : index
    %c0_1 = arith.constant 0 : index
    %0 = vector.load %arg2[%c0, %c0_0, %c0_1] : memref<1x32x128xf32, #tpu.memory_space<vmem>>, vector<1x32x128xf32>
    %1 = vector.shape_cast %0 : vector<1x32x128xf32> to vector<32x128xf32>
    %2 = arith.truncf %1 : vector<32x128xf32> to vector<32x128xbf16>
    %c0_2 = arith.constant 0 : index
    %c0_3 = arith.constant 0 : index
    %3 = vector.load %arg3[%c0_2, %c0_3] : memref<96x32xbf16, #tpu.memory_space<vmem>>, vector<96x32xbf16>
    %cst = arith.constant dense<0.000000e+00> : vector<96x128xf32>
    %4 = tpu.matmul %3, %2, %cst {dimension_numbers = #tpu.dot_dimension_numbers<[1], [0], [0], [1], [0, 0, 1, 1], [], []>} : vector<96x32xbf16>, vector<32x128xbf16>, vector<96x128xf32> -> vector<96x128xf32>
    %5 = vector.extract_strided_slice %4 {offsets = [0, 0], sizes = [32, 128], strides = [1, 1]} : vector<96x128xf32> to vector<32x128xf32>
    %c0_4 = arith.constant 0 : index
    %c0_5 = arith.constant 0 : index
    %6 = vector.load %arg7[%c0_4, %c0_5] : memref<32x128xf32, #tpu.memory_space<vmem>>, vector<32x128xf32>
    tpu.vector_store %arg7[%c0_4, %c0_5], %5 {strides = array<i32>} : memref<32x128xf32, #tpu.memory_space<vmem>>, vector<32x128xf32>,
    %7 = vector.extract_strided_slice %4 {offsets = [32, 0], sizes = [32, 128], strides = [1, 1]} : vector<96x128xf32> to vector<32x128xf32>
    %c0_6 = arith.constant 0 : index
    %c0_7 = arith.constant 0 : index
    %8 = vector.load %arg8[%c0_6, %c0_7] : memref<32x128xf32, #tpu.memory_space<vmem>>, vector<32x128xf32>
    tpu.vector_store %arg8[%c0_6, %c0_7], %7 {strides = array<i32>} : memref<32x128xf32, #tpu.memory_space<vmem>>, vector<32x128xf32>,
    %9 = vector.extract_strided_slice %4 {offsets = [64, 0], sizes = [32, 128], strides = [1, 1]} : vector<96x128xf32> to vector<32x128xf32>
    %c0_8 = arith.constant 0 : index
    %c0_9 = arith.constant 0 : index
    %10 = vector.load %arg9[%c0_8, %c0_9] : memref<32x128xf32, #tpu.memory_space<vmem>>, vector<32x128xf32>
    tpu.vector_store %arg9[%c0_8, %c0_9], %9 {strides = array<i32>} : memref<32x128xf32, #tpu.memory_space<vmem>>, vector<32x128xf32>,
    %c128_i32 = arith.constant 128 : i32
    %11 = arith.muli %arg1, %c128_i32 : i32
    %12 = tpu.assume_multiple %11, 128 : i32
    %c0_10 = arith.constant 0 : index
    %13 = arith.index_cast %12 : i32 to index
    %14 = vector.load %arg7[%c0_10, %13] : memref<32x128xf32, #tpu.memory_space<vmem>>, vector<32x128xf32>
    %15 = tpu.iota {dimensions = array<i32: 0>} : vector<128x1xi32>
    %c16_i32 = arith.constant 16 : i32
    %16 = vector.broadcast %c16_i32 : i32 to vector<128x1xi32>
    %17 = arith.cmpi slt, %15, %16 : vector<128x1xi32>
    %cst_11 = arith.constant 0.000000e+00 : f32
    %cst_12 = arith.constant -1.000000e+30 : f32
    %18 = vector.broadcast %cst_11 : f32 to vector<128x1xf32>
    %19 = vector.broadcast %cst_12 : f32 to vector<128x1xf32>
    %20 = arith.select %17, %18, %19 : vector<128x1xi1>, vector<128x1xf32>
    %21 = vector.extract_strided_slice %14 {offsets = [0, 0], sizes = [8, 128], strides = [1, 1]} : vector<32x128xf32> to vector<8x128xf32>
    %22 = arith.truncf %21 : vector<8x128xf32> to vector<8x128xbf16>
    %c0_13 = arith.constant 0 : index
    %c0_14 = arith.constant 0 : index
    %23 = vector.load %arg8[%c0_13, %c0_14] : memref<32x128xf32, #tpu.memory_space<vmem>>, vector<8x128xf32>
    %24 = arith.truncf %23 : vector<8x128xf32> to vector<8x128xbf16>
    %c0_15 = arith.constant 0 : index
    %c0_16 = arith.constant 0 : index
    %25 = vector.load %arg9[%c0_15, %c0_16] : memref<32x128xf32, #tpu.memory_space<vmem>>, vector<8x128xf32>
    %26 = arith.truncf %25 : vector<8x128xf32> to vector<8x128xbf16>
    %cst_17 = arith.constant dense<0.000000e+00> : vector<128x128xf32>
    %27 = tpu.matmul %24, %22, %cst_17 {dimension_numbers = #tpu.dot_dimension_numbers<[0], [0], [1], [1], [0, 1, 1, 1], [], []>} : vector<8x128xbf16>, vector<8x128xbf16>, vector<128x128xf32> -> vector<128x128xf32>
    %28 = vector.broadcast %20 : vector<128x1xf32> to vector<128x128xf32>
    %29 = arith.addf %27, %28 : vector<128x128xf32>
    %cst_18 = arith.constant dense<0xFF800000> : vector<128xf32>
    %30 = vector.multi_reduction <maximumf>, %29, %cst_18 [0] : vector<128x128xf32> to vector<128xf32>
    %31 = vector.shape_cast %30 : vector<128xf32> to vector<1x128xf32>
    %32 = vector.broadcast %31 : vector<1x128xf32> to vector<128x128xf32>
    %33 = arith.subf %29, %32 : vector<128x128xf32>
    %34 = arith.truncf %33 : vector<128x128xf32> to vector<128x128xbf16>
    %35 = math.exp %34 : vector<128x128xbf16>
    %36 = arith.extf %35 : vector<128x128xbf16> to vector<128x128xf32>
    %cst_19 = arith.constant dense<0.000000e+00> : vector<128xf32>
    %37 = vector.multi_reduction <add>, %36, %cst_19 [0] : vector<128x128xf32> to vector<128xf32>
    %38 = vector.shape_cast %37 : vector<128xf32> to vector<1x128xf32>
    %cst_20 = arith.constant dense<0.000000e+00> : vector<8x128xf32>
    %39 = tpu.matmul %26, %35, %cst_20 {dimension_numbers = #tpu.dot_dimension_numbers<[1], [0], [0], [1], [0, 0, 1, 1], [], []>} : vector<8x128xbf16>, vector<128x128xbf16>, vector<8x128xf32> -> vector<8x128xf32>
    %40 = tpu.reciprocal %38 {approx = true} : vector<1x128xf32> -> vector<1x128xf32>
    %41 = vector.broadcast %40 : vector<1x128xf32> to vector<8x128xf32>
    %42 = arith.mulf %39, %41 : vector<8x128xf32>
    %43 = vector.extract_strided_slice %14 {offsets = [8, 0], sizes = [8, 128], strides = [1, 1]} : vector<32x128xf32> to vector<8x128xf32>
    %44 = arith.truncf %43 : vector<8x128xf32> to vector<8x128xbf16>
    %c8 = arith.constant 8 : index
    %c0_21 = arith.constant 0 : index
    %45 = vector.load %arg8[%c8, %c0_21] : memref<32x128xf32, #tpu.memory_space<vmem>>, vector<8x128xf32>
    %46 = arith.truncf %45 : vector<8x128xf32> to vector<8x128xbf16>
    %c8_22 = arith.constant 8 : index
    %c0_23 = arith.constant 0 : index
    %47 = vector.load %arg9[%c8_22, %c0_23] : memref<32x128xf32, #tpu.memory_space<vmem>>, vector<8x128xf32>
    %48 = arith.truncf %47 : vector<8x128xf32> to vector<8x128xbf16>
    %cst_24 = arith.constant dense<0.000000e+00> : vector<128x128xf32>
    %49 = tpu.matmul %46, %44, %cst_24 {dimension_numbers = #tpu.dot_dimension_numbers<[0], [0], [1], [1], [0, 1, 1, 1], [], []>} : vector<8x128xbf16>, vector<8x128xbf16>, vector<128x128xf32> -> vector<128x128xf32>
    %50 = vector.broadcast %20 : vector<128x1xf32> to vector<128x128xf32>
    %51 = arith.addf %49, %50 : vector<128x128xf32>
    %cst_25 = arith.constant dense<0xFF800000> : vector<128xf32>
    %52 = vector.multi_reduction <maximumf>, %51, %cst_25 [0] : vector<128x128xf32> to vector<128xf32>
    %53 = vector.shape_cast %52 : vector<128xf32> to vector<1x128xf32>
    %54 = vector.broadcast %53 : vector<1x128xf32> to vector<128x128xf32>
    %55 = arith.subf %51, %54 : vector<128x128xf32>
    %56 = arith.truncf %55 : vector<128x128xf32> to vector<128x128xbf16>
    %57 = math.exp %56 : vector<128x128xbf16>
    %58 = arith.extf %57 : vector<128x128xbf16> to vector<128x128xf32>
    %cst_26 = arith.constant dense<0.000000e+00> : vector<128xf32>
    %59 = vector.multi_reduction <add>, %58, %cst_26 [0] : vector<128x128xf32> to vector<128xf32>
    %60 = vector.shape_cast %59 : vector<128xf32> to vector<1x128xf32>
    %cst_27 = arith.constant dense<0.000000e+00> : vector<8x128xf32>
    %61 = tpu.matmul %48, %57, %cst_27 {dimension_numbers = #tpu.dot_dimension_numbers<[1], [0], [0], [1], [0, 0, 1, 1], [], []>} : vector<8x128xbf16>, vector<128x128xbf16>, vector<8x128xf32> -> vector<8x128xf32>
    %62 = tpu.reciprocal %60 {approx = true} : vector<1x128xf32> -> vector<1x128xf32>
    %63 = vector.broadcast %62 : vector<1x128xf32> to vector<8x128xf32>
    %64 = arith.mulf %61, %63 : vector<8x128xf32>
    %65 = vector.extract_strided_slice %14 {offsets = [16, 0], sizes = [8, 128], strides = [1, 1]} : vector<32x128xf32> to vector<8x128xf32>
    %66 = arith.truncf %65 : vector<8x128xf32> to vector<8x128xbf16>
    %c16 = arith.constant 16 : index
    %c0_28 = arith.constant 0 : index
    %67 = vector.load %arg8[%c16, %c0_28] : memref<32x128xf32, #tpu.memory_space<vmem>>, vector<8x128xf32>
    %68 = arith.truncf %67 : vector<8x128xf32> to vector<8x128xbf16>
    %c16_29 = arith.constant 16 : index
    %c0_30 = arith.constant 0 : index
    %69 = vector.load %arg9[%c16_29, %c0_30] : memref<32x128xf32, #tpu.memory_space<vmem>>, vector<8x128xf32>
    %70 = arith.truncf %69 : vector<8x128xf32> to vector<8x128xbf16>
    %cst_31 = arith.constant dense<0.000000e+00> : vector<128x128xf32>
    %71 = tpu.matmul %68, %66, %cst_31 {dimension_numbers = #tpu.dot_dimension_numbers<[0], [0], [1], [1], [0, 1, 1, 1], [], []>} : vector<8x128xbf16>, vector<8x128xbf16>, vector<128x128xf32> -> vector<128x128xf32>
    %72 = vector.broadcast %20 : vector<128x1xf32> to vector<128x128xf32>
    %73 = arith.addf %71, %72 : vector<128x128xf32>
    %cst_32 = arith.constant dense<0xFF800000> : vector<128xf32>
    %74 = vector.multi_reduction <maximumf>, %73, %cst_32 [0] : vector<128x128xf32> to vector<128xf32>
    %75 = vector.shape_cast %74 : vector<128xf32> to vector<1x128xf32>
    %76 = vector.broadcast %75 : vector<1x128xf32> to vector<128x128xf32>
    %77 = arith.subf %73, %76 : vector<128x128xf32>
    %78 = arith.truncf %77 : vector<128x128xf32> to vector<128x128xbf16>
    %79 = math.exp %78 : vector<128x128xbf16>
    %80 = arith.extf %79 : vector<128x128xbf16> to vector<128x128xf32>
    %cst_33 = arith.constant dense<0.000000e+00> : vector<128xf32>
    %81 = vector.multi_reduction <add>, %80, %cst_33 [0] : vector<128x128xf32> to vector<128xf32>
    %82 = vector.shape_cast %81 : vector<128xf32> to vector<1x128xf32>
    %cst_34 = arith.constant dense<0.000000e+00> : vector<8x128xf32>
    %83 = tpu.matmul %70, %79, %cst_34 {dimension_numbers = #tpu.dot_dimension_numbers<[1], [0], [0], [1], [0, 0, 1, 1], [], []>} : vector<8x128xbf16>, vector<128x128xbf16>, vector<8x128xf32> -> vector<8x128xf32>
    %84 = tpu.reciprocal %82 {approx = true} : vector<1x128xf32> -> vector<1x128xf32>
    %85 = vector.broadcast %84 : vector<1x128xf32> to vector<8x128xf32>
    %86 = arith.mulf %83, %85 : vector<8x128xf32>
    %87 = vector.extract_strided_slice %14 {offsets = [24, 0], sizes = [8, 128], strides = [1, 1]} : vector<32x128xf32> to vector<8x128xf32>
    %88 = arith.truncf %87 : vector<8x128xf32> to vector<8x128xbf16>
    %c24 = arith.constant 24 : index
    %c0_35 = arith.constant 0 : index
    %89 = vector.load %arg8[%c24, %c0_35] : memref<32x128xf32, #tpu.memory_space<vmem>>, vector<8x128xf32>
    %90 = arith.truncf %89 : vector<8x128xf32> to vector<8x128xbf16>
    %c24_36 = arith.constant 24 : index
    %c0_37 = arith.constant 0 : index
    %91 = vector.load %arg9[%c24_36, %c0_37] : memref<32x128xf32, #tpu.memory_space<vmem>>, vector<8x128xf32>
    %92 = arith.truncf %91 : vector<8x128xf32> to vector<8x128xbf16>
    %cst_38 = arith.constant dense<0.000000e+00> : vector<128x128xf32>
    %93 = tpu.matmul %90, %88, %cst_38 {dimension_numbers = #tpu.dot_dimension_numbers<[0], [0], [1], [1], [0, 1, 1, 1], [], []>} : vector<8x128xbf16>, vector<8x128xbf16>, vector<128x128xf32> -> vector<128x128xf32>
    %94 = vector.broadcast %20 : vector<128x1xf32> to vector<128x128xf32>
    %95 = arith.addf %93, %94 : vector<128x128xf32>
    %cst_39 = arith.constant dense<0xFF800000> : vector<128xf32>
    %96 = vector.multi_reduction <maximumf>, %95, %cst_39 [0] : vector<128x128xf32> to vector<128xf32>
    %97 = vector.shape_cast %96 : vector<128xf32> to vector<1x128xf32>
    %98 = vector.broadcast %97 : vector<1x128xf32> to vector<128x128xf32>
    %99 = arith.subf %95, %98 : vector<128x128xf32>
    %100 = arith.truncf %99 : vector<128x128xf32> to vector<128x128xbf16>
    %101 = math.exp %100 : vector<128x128xbf16>
    %102 = arith.extf %101 : vector<128x128xbf16> to vector<128x128xf32>
    %cst_40 = arith.constant dense<0.000000e+00> : vector<128xf32>
    %103 = vector.multi_reduction <add>, %102, %cst_40 [0] : vector<128x128xf32> to vector<128xf32>
    %104 = vector.shape_cast %103 : vector<128xf32> to vector<1x128xf32>
    %cst_41 = arith.constant dense<0.000000e+00> : vector<8x128xf32>
    %105 = tpu.matmul %92, %101, %cst_41 {dimension_numbers = #tpu.dot_dimension_numbers<[1], [0], [0], [1], [0, 0, 1, 1], [], []>} : vector<8x128xbf16>, vector<128x128xbf16>, vector<8x128xf32> -> vector<8x128xf32>
    %106 = tpu.reciprocal %104 {approx = true} : vector<1x128xf32> -> vector<1x128xf32>
    %107 = vector.broadcast %106 : vector<1x128xf32> to vector<8x128xf32>
    %108 = arith.mulf %105, %107 : vector<8x128xf32>
    %109 = tpu.concatenate %42, %64, %86, %108 in 0 : vector<8x128xf32>, vector<8x128xf32>, vector<8x128xf32>, vector<8x128xf32> -> vector<32x128xf32>
    %110 = arith.truncf %109 : vector<32x128xf32> to vector<32x128xbf16>
    %c0_42 = arith.constant 0 : index
    %c0_43 = arith.constant 0 : index
    %111 = vector.load %arg4[%c0_42, %c0_43] : memref<32x32xbf16, #tpu.memory_space<vmem>>, vector<32x32xbf16>
    %cst_44 = arith.constant dense<0.000000e+00> : vector<32x128xf32>
    %112 = tpu.matmul %111, %110, %cst_44 {dimension_numbers = #tpu.dot_dimension_numbers<[1], [0], [0], [1], [0, 0, 1, 1], [], []>} : vector<32x32xbf16>, vector<32x128xbf16>, vector<32x128xf32> -> vector<32x128xf32>
    %c0_45 = arith.constant 0 : index
    %c0_46 = arith.constant 0 : index
    %113 = vector.load %arg5[%c0_45, %c0_46] : memref<32x1xf32, #tpu.memory_space<vmem>>, vector<32x1xf32>
    %114 = vector.broadcast %113 : vector<32x1xf32> to vector<32x128xf32>
    %115 = arith.addf %112, %114 : vector<32x128xf32>
    %c0_47 = arith.constant 0 : index
    %c0_48 = arith.constant 0 : index
    %c0_49 = arith.constant 0 : index
    %116 = vector.load %arg6[%c0_47, %c0_48, %c0_49] : memref<1x32x128xf32, #tpu.memory_space<vmem>>, vector<1x32x128xf32>
    %117 = vector.shape_cast %116 : vector<1x32x128xf32> to vector<32x128xf32>
    %118 = vector.shape_cast %115 : vector<32x128xf32> to vector<1x32x128xf32>
    tpu.vector_store %arg6[%c0_47, %c0_48, %c0_49], %118 {strides = array<i32>} : memref<1x32x128xf32, #tpu.memory_space<vmem>>, vector<1x32x128xf32>,
    return
  }
  func.func @transform_0(%arg0: i32, %arg1: i32) -> (i32, i32, i32) {
    %c0_i32 = arith.constant 0 : i32
    %c0_i32_0 = arith.constant 0 : i32
    %c0_i32_1 = arith.constant 0 : i32
    return %arg0, %c0_i32, %c0_i32_0 : i32, i32, i32
  }
  func.func @transform_1(%arg0: i32, %arg1: i32) -> (i32, i32) {
    %c0_i32 = arith.constant 0 : i32
    %c0_i32_0 = arith.constant 0 : i32
    %c0_i32_1 = arith.constant 0 : i32
    return %c0_i32, %c0_i32_0 : i32, i32
  }
  func.func @transform_2(%arg0: i32, %arg1: i32) -> (i32, i32) {
    %c0_i32 = arith.constant 0 : i32
    %c0_i32_0 = arith.constant 0 : i32
    %c0_i32_1 = arith.constant 0 : i32
    return %c0_i32, %c0_i32_0 : i32, i32
  }
  func.func @transform_3(%arg0: i32, %arg1: i32) -> (i32, i32) {
    %c0_i32 = arith.constant 0 : i32
    %c0_i32_0 = arith.constant 0 : i32
    %c0_i32_1 = arith.constant 0 : i32
    return %c0_i32, %c0_i32_0 : i32, i32
  }
  func.func @transform_4(%arg0: i32, %arg1: i32) -> (i32, i32, i32) {
    %c0_i32 = arith.constant 0 : i32
    %c0_i32_0 = arith.constant 0 : i32
    return %arg0, %c0_i32, %arg1 : i32, i32, i32
  }
}

</mosaic_0001>

<llo_original>
// kernel: tpu_custom_call.1
$region0: #{tpu_custom_call.1}
  #allocation0 [shape = 'u32[]', space=smem, size = 0x4, offset = 0x4, fixed_abs, tag = 'smem constant byte address 0x4 - core index']
  #allocation1 [shape = 'u32[144,128]{1,0:T(1,128)}', space=vmem, size = 0x12000, scoped, tag = 'internal scratch']
  #allocation2 [shape = 'f32[32,128]{1,0:T(8,128)}', space=vmem, size = 0x4000, scoped, tag = 'scratch operand']
  #allocation3 [shape = 'f32[32,128]{1,0:T(8,128)}', space=vmem, size = 0x4000, scoped, tag = 'scratch operand']
  #allocation4 [shape = 'f32[32,128]{1,0:T(8,128)}', space=vmem, size = 0x4000, scoped, tag = 'scratch operand']
  %s0 = inlined_call_operand.vmem [shape: f32[2,32,128], index: 0, kind: input, shape index: {}]
  %s1 = inlined_call_operand.vmem [shape: bf16[96,32], index: 1, kind: input, shape index: {}]
  %s2 = inlined_call_operand.vmem [shape: bf16[32,32], index: 2, kind: input, shape index: {}]
  %s3 = inlined_call_operand.vmem [shape: f32[32,1], index: 3, kind: input, shape index: {}]
  %s4 = inlined_call_operand.hbm [shape: f32[2,32,128], index: 4, kind: output, shape index: {}]
  %s5 = sld [smem:[#allocation0]]
  $region49: #{tpu_custom_call.1} parent=0
    _
  %s7 = ssub.s32 1, %s5
  %s8 = scalar_select 0, %s7, %s5
  $region1: #{tpu_custom_call.1} parent=0
    #allocation5 [shape = 'u8[32768]{0}', space=vmem, size = 0x8000, scoped, tag = 'output window, operand 0']
    #allocation6 [shape = 's32[2]{0}', space=sflag, size = 0x8, scoped, tag = 'scoped memory for tpu_custom_call.1']
    %9 = vsyncpa [#allocation6], 0
    %s10 = scalar_lea.sflag [#allocation6], 1
    %11 = vsyncpa %s10, 0
    loop: start=0, step=1, limit=4
    $region2: #{tpu_custom_call.1} parent=1 // loop_pre_header
      _
    $region3: #{tpu_custom_call.1} parent=1 // loop_header
      %s13 = sphi 0, %s17
      %p14 = scmp.ge.s32.totalorder %s13, 4
      %s20 = sphi 0, %s32
      %s21 = sphi 0, %s28
      %s22 = sphi 0, %s20
      %s23 = sphi 0, %s21
      %s24 = sphi 0, %s22
      %s25 = sphi 0, %s23
      %s35 = sphi 0, %s37
      %s38 = sphi 0, %s35
      %s39 = sphi 0, %s38
      %s55 = sphi 0, %s39
      %s59 = sphi 0, %s59
      %s61 = sphi 0, %s59
      %s62 = sphi 0, %s61
      %s76 = sphi 0, %s62
      %s80 = sphi 0, %s80
      %s82 = sphi 0, %s80
      %s83 = sphi 0, %s82
      %s97 = sphi 0, %s83
      %s101 = sphi 0, %s101
      %s103 = sphi 0, %s101
      %s104 = sphi 0, %s103
      %s118 = sphi 0, %s104
      %s126 = sphi 0, %s128
      %s129 = sphi 0, %s126
      %s130 = sphi 0, %s129
      %s146 = sphi 0, %s130
    $region4: #{tpu_custom_call.1} parent=1 // loop_header_branch
      %16 = sbr.rel (%p14) target = $region8
    $region5: #{tpu_custom_call.1} parent=1 // loop_body
      %s18 = ssub.s32 %s13, 1
      %s19 = ssub.s32 %s13, 2
      %s26 = sadd.s32 1, %s21
      %p27 = scmp.ge.s32.totalorder %s26, 1
      %s28 = scalar_select %p27, 0, %s26
      %s29 = sadd.s32 1, %s20
      %s30 = scalar_select %p27, %s29, %s20
      %p31 = scmp.ge.s32.totalorder %s30, 2
      %s32 = scalar_select %p31, 0, %s30
      %s33 = ssub.s32 %s20, %s32
      %p34 = scmp.eq.s32.totalorder %s33, 0
      %s36 = sadd.s32 %s35, 1
      %s37 = scalar_select %p34, %s35, %s36
      %p40 = pneg %p34
      %p41 = scmp.eq.s32.totalorder %s13, 1
      %p42 = por %p40, %p41
      %p43 = scmp.ne.s32.totalorder %s35, %s38
      %p44 = scmp.eq.s32.totalorder %s13, 0
      %p45 = por %p43, %p44
      %p46 = scmp.ne.s32.totalorder %s35, %s38
      %p47 = scmp.eq.s32.totalorder %s18, 1
      %p48 = por %p46, %p47
      %p49 = scmp.ne.s32.totalorder %s38, %s39
      %p50 = scmp.eq.s32.totalorder %s18, 0
      %p51 = por %p49, %p50
      %p52 = scmp.ne.s32.totalorder %s38, %s39
      %p53 = scmp.eq.s32.totalorder %s19, 1
      %p54 = por %p52, %p53
      %p56 = scmp.ne.s32.totalorder %s39, %s55
      %p57 = scmp.eq.s32.totalorder %s19, 0
      %p58 = por %p56, %p57
      %s60 = sadd.s32 %s59, 1
      %p63 = scmp.eq.s32.totalorder %s13, 1
      %p64 = scmp.ne.s32.totalorder %s59, %s61
      %p65 = scmp.eq.s32.totalorder %s13, 0
      %p66 = por %p64, %p65
      %p67 = scmp.ne.s32.totalorder %s59, %s61
      %p68 = scmp.eq.s32.totalorder %s18, 1
      %p69 = por %p67, %p68
      %p70 = scmp.ne.s32.totalorder %s61, %s62
      %p71 = scmp.eq.s32.totalorder %s18, 0
      %p72 = por %p70, %p71
      %p73 = scmp.ne.s32.totalorder %s61, %s62
      %p74 = scmp.eq.s32.totalorder %s19, 1
      %p75 = por %p73, %p74
      %p77 = scmp.ne.s32.totalorder %s62, %s76
      %p78 = scmp.eq.s32.totalorder %s19, 0
      %p79 = por %p77, %p78
      %s81 = sadd.s32 %s80, 1
      %p84 = scmp.eq.s32.totalorder %s13, 1
      %p85 = scmp.ne.s32.totalorder %s80, %s82
      %p86 = scmp.eq.s32.totalorder %s13, 0
      %p87 = por %p85, %p86
      %p88 = scmp.ne.s32.totalorder %s80, %s82
      %p89 = scmp.eq.s32.totalorder %s18, 1
      %p90 = por %p88, %p89
      %p91 = scmp.ne.s32.totalorder %s82, %s83
      %p92 = scmp.eq.s32.totalorder %s18, 0
      %p93 = por %p91, %p92
      %p94 = scmp.ne.s32.totalorder %s82, %s83
      %p95 = scmp.eq.s32.totalorder %s19, 1
      %p96 = por %p94, %p95
      %p98 = scmp.ne.s32.totalorder %s83, %s97
      %p99 = scmp.eq.s32.totalorder %s19, 0
      %p100 = por %p98, %p99
      %s102 = sadd.s32 %s101, 1
      %p105 = scmp.eq.s32.totalorder %s13, 1
      %p106 = scmp.ne.s32.totalorder %s101, %s103
      %p107 = scmp.eq.s32.totalorder %s13, 0
      %p108 = por %p106, %p107
      %p109 = scmp.ne.s32.totalorder %s101, %s103
      %p110 = scmp.eq.s32.totalorder %s18, 1
      %p111 = por %p109, %p110
      %p112 = scmp.ne.s32.totalorder %s103, %s104
      %p113 = scmp.eq.s32.totalorder %s18, 0
      %p114 = por %p112, %p113
      %p115 = scmp.ne.s32.totalorder %s103, %s104
      %p116 = scmp.eq.s32.totalorder %s19, 1
      %p117 = por %p115, %p116
      %p119 = scmp.ne.s32.totalorder %s104, %s118
      %p120 = scmp.eq.s32.totalorder %s19, 0
      %p121 = por %p119, %p120
      %s122 = ssub.s32 %s20, %s32
      %s123 = ssub.s32 %s21, %s28
      %s124 = sor.u32 %s122, %s123
      %p125 = scmp.eq.s32.totalorder %s124, 0
      %s127 = sadd.s32 %s126, 1
      %s128 = scalar_select %p125, %s126, %s127
      %p131 = pneg %p125
      %p132 = scmp.eq.s32.totalorder %s13, 1
      %p133 = por %p131, %p132
      %p134 = scmp.ne.s32.totalorder %s126, %s129
      %p135 = scmp.eq.s32.totalorder %s13, 0
      %p136 = por %p134, %p135
      %p137 = scmp.ne.s32.totalorder %s126, %s129
      %p138 = scmp.eq.s32.totalorder %s18, 1
      %p139 = por %p137, %p138
      %p140 = scmp.ne.s32.totalorder %s129, %s130
      %p141 = scmp.eq.s32.totalorder %s18, 0
      %p142 = por %p140, %p141
      %p143 = scmp.ne.s32.totalorder %s129, %s130
      %p144 = scmp.eq.s32.totalorder %s19, 1
      %p145 = por %p143, %p144
      %p147 = scmp.ne.s32.totalorder %s130, %s146
      %p148 = scmp.eq.s32.totalorder %s19, 0
      %p149 = por %p147, %p148
      %p150 = scmp.le.s32.totalorder 1, %s13
      %p151 = scmp.lt.s32.totalorder %s13, 3
      %p152 = pnand %p150, %p151
      %p153 = pneg %p152
      // Predicated region
      $region9: #{tpu_custom_call.1} parent=5 // pred_check
        _
      $region10: #{tpu_custom_call.1} parent=5 // pred_check_branch
        %155 = sbr.rel (%p152) target = $region12
      $region11: #{tpu_custom_call.1} parent=5 // pred_region
        %s156 = ssub.s32 %s13, 1
        // Predicated region
        $region13: #{tpu_custom_call.1} parent=11 // pred_check
          %p157 = pneg %p72
        $region14: #{tpu_custom_call.1} parent=11 // pred_check_branch
          %159 = sbr.rel (%p157) target = $region16
        $region15: #{tpu_custom_call.1} parent=11 // pred_region
          _
        $region16: #{tpu_custom_call.1} parent=11 // pred_fallthru
          _
        // Predicated region
        $region17: #{tpu_custom_call.1} parent=11 // pred_check
          %p160 = pneg %p93
        $region18: #{tpu_custom_call.1} parent=11 // pred_check_branch
          %162 = sbr.rel (%p160) target = $region20
        $region19: #{tpu_custom_call.1} parent=11 // pred_region
          _
        $region20: #{tpu_custom_call.1} parent=11 // pred_fallthru
          _
        // Predicated region
        $region21: #{tpu_custom_call.1} parent=11 // pred_check
          %p163 = pneg %p114
        $region22: #{tpu_custom_call.1} parent=11 // pred_check_branch
          %165 = sbr.rel (%p163) target = $region24
        $region23: #{tpu_custom_call.1} parent=11 // pred_region
          _
        $region24: #{tpu_custom_call.1} parent=11 // pred_fallthru
          _
      $region12: #{tpu_custom_call.1} parent=5 // pred_fallthru
        _
      %p166 = scmp.lt.s32.totalorder %s13, 2
      // Predicated region
      $region25: #{tpu_custom_call.1} parent=5 // pred_check
        %p167 = pneg %p166
      $region26: #{tpu_custom_call.1} parent=5 // pred_check_branch
        %169 = sbr.rel (%p167) target = $region28
      $region27: #{tpu_custom_call.1} parent=5 // pred_region
        // Predicated region
        $region29: #{tpu_custom_call.1} parent=27 // pred_check
          %p170 = pneg %p45
        $region30: #{tpu_custom_call.1} parent=27 // pred_check_branch
          %172 = sbr.rel (%p170) target = $region32
        $region31: #{tpu_custom_call.1} parent=27 // pred_region
          %p173 = scmp.lt.s32.totalorder %s20, 1
          %s174 = scalar_select %p173, %s20, 1
          %s175 = smul.addr %s174, 4
          %s176 = smul.addr %s175, 8
          %s177 = scalar_lea.vmem %s0, %s176
        $region32: #{tpu_custom_call.1} parent=27 // pred_fallthru
          _
      $region28: #{tpu_custom_call.1} parent=5 // pred_fallthru
        _
      %p178 = scmp.le.s32.totalorder 1, %s13
      %p179 = scmp.lt.s32.totalorder %s13, 3
      %p180 = pnand %p178, %p179
      %p181 = pneg %p180
      // Predicated region
      $region33: #{tpu_custom_call.1} parent=5 // pred_check
        _
      $region34: #{tpu_custom_call.1} parent=5 // pred_check_branch
        %183 = sbr.rel (%p180) target = $region36
      $region35: #{tpu_custom_call.1} parent=5 // pred_region
        %s184 = ssub.s32 %s13, 1
        %p185 = scmp.lt.s32.totalorder %s22, 1
        %s186 = scalar_select %p185, %s22, 1
        %s187 = smul.addr %s186, 4
        %s188 = smul.addr %s187, 8
        %s189 = scalar_lea.vmem %s0, %s188
        %p190 = pneg %p51
        %p191 = pneg %p48
        %p192 = pneg %p72
        %p193 = pneg %p69
        %p194 = pneg %p93
        %p195 = pneg %p90
        %p196 = pneg %p114
        %p197 = pneg %p111
        %p198 = pneg %p142
        %p199 = pneg %p139
        %s200 = sand.u32 %s129, 1
        %s201 = scalar_lea.sflag [#allocation6], %s200
        %s202 = sand.u32 %s129, 1
        %s203 = smul.addr %s202, 32
        %s204 = scalar_lea.vmem [#allocation5], %s203
        %p205 = scmp.lt.s32.totalorder %s22, 1
        %s206 = scalar_select %p205, %s22, 1
        %s207 = smul.addr %s206, 4
        %s208 = smul.addr %s207, 8
        %s209 = scalar_lea.vmem %s0, %s208
        %v211 = vld [vmem:[%s209] sm:$0xff]
        %v212 = vld [vmem:[%s209 + $0x8] sm:$0xff]
        %v213 = vld [vmem:[%s209 + $0x10] sm:$0xff]
        %v214 = vld [vmem:[%s209 + $0x18] sm:$0xff]
        %v215 = vpack.c.bf16 %v212, %v211
        %v216 = vpack.c.bf16 %v214, %v213
        %v217 = vld [vmem:[%s1] sm:$0xf]
        %v218 = vld [vmem:[%s1 + $0x4] sm:$0xf]
        %v219 = vld [vmem:[%s1 + $0x8] sm:$0xf]
        %v220 = vld [vmem:[%s1 + $0xc] sm:$0xf]
        %v221 = vld [vmem:[%s1 + $0x10] sm:$0xf]
        %v222 = vld [vmem:[%s1 + $0x14] sm:$0xf]
        %v223 = vld [vmem:[%s1 + $0x18] sm:$0xf]
        %v224 = vld [vmem:[%s1 + $0x1c] sm:$0xf]
        %v225 = vld [vmem:[%s1 + $0x20] sm:$0xf]
        %v226 = vld [vmem:[%s1 + $0x24] sm:$0xf]
        %v227 = vld [vmem:[%s1 + $0x28] sm:$0xf]
        %v228 = vld [vmem:[%s1 + $0x2c] sm:$0xf]
        %v241 = vunpack.c.l.b16 %v217
        %v242 = vunpack.c.l.b16 %v218
        %v243 = vunpack.c.l.b16 %v219
        %v244 = vunpack.c.l.b16 %v220
        %v245 = vunpack.c.l.b16 %v221
        %v246 = vunpack.c.l.b16 %v222
        %v247 = vunpack.c.l.b16 %v223
        %v248 = vunpack.c.l.b16 %v224
        %v249 = vunpack.c.l.b16 %v225
        %v250 = vunpack.c.l.b16 %v226
        %v251 = vunpack.c.l.b16 %v227
        %v252 = vunpack.c.l.b16 %v228
        %v253 = vpack.c.b16 %v242, %v241
        %v254 = vpack.c.b16 %v244, %v243
        %v255 = vpack.c.b16 %v246, %v245
        %v256 = vpack.c.b16 %v248, %v247
        %v257 = vpack.c.b16 %v250, %v249
        %v258 = vpack.c.b16 %v252, %v251
        %vm259 = vcmask 261120
        %v261 = vsel %vm259, %v253, 0
        %v264 = vsel %vm259, %v254, 0
        %v267 = vsel %vm259, %v255, 0
        %v270 = vsel %vm259, %v256, 0
        %v273 = vsel %vm259, %v257, 0
        %v276 = vsel %vm259, %v258, 0
        %278 = vmatprep.subr.bf16.mxu0 0
        %279 = vmatpush1.bf16.msra.mxu0 %v215
        %280 = vmatprep.subr.bf16.mxu0 0
        %281 = vmatpush1.bf16.msra.mxu0 %v216
        %282 = vmatprep.subr.bf16.mxu0 0
        %283 = vmatpush1.bf16.msra.mxu0 0
        %284 = vmatprep.subr.bf16.mxu0 0
        %285 = vmatpush1.bf16.msra.mxu0 0
        %286 = vmatprep.subr.bf16.mxu0 0
        %287 = vmatpush1.bf16.msra.mxu0 0
        %288 = vmatprep.subr.bf16.mxu0 0
        %289 = vmatpush1.bf16.msra.mxu0 0
        %290 = vmatprep.subr.bf16.mxu0 0
        %291 = vmatpush1.bf16.msra.mxu0 0
        %292 = vmatprep.subr.bf16.mxu0 0
        %293 = vmatpush1.bf16.msra.mxu0 0
        %294 = vmatprep.subr.bf16.mxu0 0
        %295 = vmatpush1.bf16.msra.mxu0 0
        %296 = vmatprep.subr.bf16.mxu0 0
        %297 = vmatpush1.bf16.msra.mxu0 0
        %298 = vmatprep.subr.bf16.mxu0 0
        %299 = vmatpush1.bf16.msra.mxu0 0
        %300 = vmatprep.subr.bf16.mxu0 0
        %301 = vmatpush1.bf16.msra.mxu0 0
        %302 = vmatprep.subr.bf16.mxu0 0
        %303 = vmatpush1.bf16.msra.mxu0 0
        %304 = vmatprep.subr.bf16.mxu0 0
        %305 = vmatpush1.bf16.msra.mxu0 0
        %306 = vmatprep.subr.bf16.mxu0 0
        %307 = vmatpush1.bf16.msra.mxu0 0
        %308 = vmatprep.subr.bf16.mxu0 0
        %309 = vmatpush1.bf16.msra.mxu0 0
        %310 = vmatprep.mubr.bf16.mxu0 0
        %311 = vmatmul.mubr.bf16.gmra.mrb[0].mxu0 %v261
        %v312 = vpop.f32.mrb[0].mxu0
        %v313 = vadd.f32 0.0, %v312
        %v314 = vpop.f32.mrb[0].mxu0
        %v315 = vpop.f32.mrb[0].mxu0
        %v316 = vadd.f32 0.0, %v315
        %v317 = vpop.f32.mrb[0].mxu0
        %318 = vmatprep.mubr.bf16.mxu0 0
        %319 = vmatmul.mubr.bf16.gmra.mrb[0].mxu0 %v264
        %v320 = vpop.f32.mrb[0].mxu0
        %v321 = vadd.f32 0.0, %v320
        %v322 = vpop.f32.mrb[0].mxu0
        %v323 = vpop.f32.mrb[0].mxu0
        %v324 = vadd.f32 0.0, %v323
        %v325 = vpop.f32.mrb[0].mxu0
        %326 = vmatprep.mubr.bf16.mxu0 0
        %327 = vmatmul.mubr.bf16.gmra.mrb[0].mxu0 %v267
        %v328 = vpop.f32.mrb[0].mxu0
        %v329 = vadd.f32 0.0, %v328
        %v330 = vpop.f32.mrb[0].mxu0
        %v331 = vpop.f32.mrb[0].mxu0
        %v332 = vadd.f32 0.0, %v331
        %v333 = vpop.f32.mrb[0].mxu0
        %334 = vmatprep.mubr.bf16.mxu0 0
        %335 = vmatmul.mubr.bf16.gmra.mrb[0].mxu0 %v270
        %v336 = vpop.f32.mrb[0].mxu0
        %v337 = vadd.f32 0.0, %v336
        %v338 = vpop.f32.mrb[0].mxu0
        %v339 = vpop.f32.mrb[0].mxu0
        %v340 = vadd.f32 0.0, %v339
        %v341 = vpop.f32.mrb[0].mxu0
        %342 = vmatprep.mubr.bf16.mxu0 0
        %343 = vmatmul.mubr.bf16.gmra.mrb[0].mxu0 %v273
        %v344 = vpop.f32.mrb[0].mxu0
        %v345 = vadd.f32 0.0, %v344
        %v346 = vpop.f32.mrb[0].mxu0
        %v347 = vpop.f32.mrb[0].mxu0
        %v348 = vadd.f32 0.0, %v347
        %v349 = vpop.f32.mrb[0].mxu0
        %350 = vmatprep.mubr.bf16.mxu0 0
        %351 = vmatmul.mubr.bf16.gmra.mrb[0].mxu0 %v276
        %v352 = vpop.f32.mrb[0].mxu0
        %v353 = vadd.f32 0.0, %v352
        %v354 = vpop.f32.mrb[0].mxu0
        %v355 = vpop.f32.mrb[0].mxu0
        %v356 = vadd.f32 0.0, %v355
        %v357 = vpop.f32.mrb[0].mxu0
        %358 = vdwg.mxu0
        %359 = vst [vmem:[#allocation2] sm:$0xff] %v313
        %360 = vst [vmem:[#allocation2 + $0x8] sm:$0xff] %v316
        %361 = vst [vmem:[#allocation2 + $0x10] sm:$0xff] %v321
        %362 = vst [vmem:[#allocation2 + $0x18] sm:$0xff] %v324
        %363 = vst [vmem:[#allocation3] sm:$0xff] %v329
        %364 = vst [vmem:[#allocation3 + $0x8] sm:$0xff] %v332
        %365 = vst [vmem:[#allocation3 + $0x10] sm:$0xff] %v337
        %366 = vst [vmem:[#allocation3 + $0x18] sm:$0xff] %v340
        %367 = vst [vmem:[#allocation4] sm:$0xff] %v345
        %368 = vst [vmem:[#allocation4 + $0x8] sm:$0xff] %v348
        %369 = vst [vmem:[#allocation4 + $0x10] sm:$0xff] %v353
        %370 = vst [vmem:[#allocation4 + $0x18] sm:$0xff] %v356
        %s371 = smul.u32 %s23, 128
        %s372 = sshra.s32 %s371, 7
        %s373 = sand.u32 %s371, 127
        %s374 = scalar_lea.vmem [#allocation2], %s372
        %v375 = vld [vmem:[%s374] sm:$0xff]
        %v376 = vld [vmem:[%s374 + $0x8] sm:$0xff]
        %v377 = vld [vmem:[%s374 + $0x10] sm:$0xff]
        %v378 = vld [vmem:[%s374 + $0x18] sm:$0xff]
        %v379 = vlaneseq
        %v380 = vshrl.u32 %v379, 7
        %v381 = vadd.s32 %v380, 8
        %v382 = vadd.s32 %v380, 16
        %v383 = vadd.s32 %v380, 24
        %v384 = vadd.s32 %v380, 32
        %v385 = vadd.s32 %v380, 40
        %v386 = vadd.s32 %v380, 48
        %v387 = vadd.s32 %v380, 56
        %v388 = vadd.s32 %v380, 64
        %v389 = vadd.s32 %v380, 72
        %v390 = vadd.s32 %v380, 80
        %v391 = vadd.s32 %v380, 88
        %v392 = vadd.s32 %v380, 96
        %v393 = vadd.s32 %v380, 104
        %v394 = vadd.s32 %v380, 112
        %v395 = vadd.s32 %v380, 120
        %vm396 = vcmp.lt.s32.totalorder %v380, 16
        %vm397 = vcmp.lt.s32.totalorder %v381, 16
        %vm398 = vcmp.lt.s32.totalorder %v382, 16
        %vm399 = vcmp.lt.s32.totalorder %v383, 16
        %vm400 = vcmp.lt.s32.totalorder %v384, 16
        %vm401 = vcmp.lt.s32.totalorder %v385, 16
        %vm402 = vcmp.lt.s32.totalorder %v386, 16
        %vm403 = vcmp.lt.s32.totalorder %v387, 16
        %vm404 = vcmp.lt.s32.totalorder %v388, 16
        %vm405 = vcmp.lt.s32.totalorder %v389, 16
        %vm406 = vcmp.lt.s32.totalorder %v390, 16
        %vm407 = vcmp.lt.s32.totalorder %v391, 16
        %vm408 = vcmp.lt.s32.totalorder %v392, 16
        %vm409 = vcmp.lt.s32.totalorder %v393, 16
        %vm410 = vcmp.lt.s32.totalorder %v394, 16
        %vm411 = vcmp.lt.s32.totalorder %v395, 16
        %v412 = vsel %vm396, 0.0, -1e+30
        %v413 = vsel %vm397, 0.0, -1e+30
        %v414 = vsel %vm398, 0.0, -1e+30
        %v415 = vsel %vm399, 0.0, -1e+30
        %v416 = vsel %vm400, 0.0, -1e+30
        %v417 = vsel %vm401, 0.0, -1e+30
        %v418 = vsel %vm402, 0.0, -1e+30
        %v419 = vsel %vm403, 0.0, -1e+30
        %v420 = vsel %vm404, 0.0, -1e+30
        %v421 = vsel %vm405, 0.0, -1e+30
        %v422 = vsel %vm406, 0.0, -1e+30
        %v423 = vsel %vm407, 0.0, -1e+30
        %v424 = vsel %vm408, 0.0, -1e+30
        %v425 = vsel %vm409, 0.0, -1e+30
        %v426 = vsel %vm410, 0.0, -1e+30
        %v427 = vsel %vm411, 0.0, -1e+30
        %v428 = vpack.c.bf16 %v375, %v375
        %v429 = vld [vmem:[#allocation3] sm:$0xff]
        %v430 = vpack.c.bf16 %v429, %v429
        %v431 = vld [vmem:[#allocation4] sm:$0xff]
        %v432 = vpack.c.bf16 %v431, %v431
        %433 = vxpose.xlu0.c.b16.start [1/8] %v430, 128
        %434 = vxpose.xlu0.c.b16.cont [2/8] 0, 128
        %435 = vxpose.xlu0.c.b16.cont [3/8] 0, 128
        %436 = vxpose.xlu0.c.b16.cont [4/8] 0, 128
        %437 = vxpose.xlu0.c.b16.cont [5/8] 0, 128
        %438 = vxpose.xlu0.c.b16.cont [6/8] 0, 128
        %439 = vxpose.xlu0.c.b16.cont [7/8] 0, 128
        %440 = vxpose.xlu0.c.b16.end [8/8] 0, 128
        %v441 = vpop.trf.xlu0
        %v442 = vpop.trf.xlu0
        %v443 = vpop.trf.xlu0
        %v444 = vpop.trf.xlu0
        %v445 = vpop.trf.xlu0
        %v446 = vpop.trf.xlu0
        %v447 = vpop.trf.xlu0
        %v448 = vpop.trf.xlu0
        %vm449 = vcmask 64512
        %v451 = vsel %vm449, %v441, 0
        %v454 = vsel %vm449, %v442, 0
        %v457 = vsel %vm449, %v443, 0
        %v460 = vsel %vm449, %v444, 0
        %v463 = vsel %vm449, %v445, 0
        %v466 = vsel %vm449, %v446, 0
        %v469 = vsel %vm449, %v447, 0
        %v472 = vsel %vm449, %v448, 0
        %vm474 = vcmask 1043456
        %v476 = vsel %vm474, %v428, 0
        %478 = vmatprep.subr.bf16.mxu0 0
        %479 = vmatpush1.bf16.msra.mxu0 %v476
        %480 = vmatprep.subr.bf16.mxu0 0
        %481 = vmatpush1.bf16.msra.mxu0 0
        %482 = vmatprep.subr.bf16.mxu0 0
        %483 = vmatpush1.bf16.msra.mxu0 0
        %484 = vmatprep.subr.bf16.mxu0 0
        %485 = vmatpush1.bf16.msra.mxu0 0
        %486 = vmatprep.subr.bf16.mxu0 0
        %487 = vmatpush1.bf16.msra.mxu0 0
        %488 = vmatprep.subr.bf16.mxu0 0
        %489 = vmatpush1.bf16.msra.mxu0 0
        %490 = vmatprep.subr.bf16.mxu0 0
        %491 = vmatpush1.bf16.msra.mxu0 0
        %492 = vmatprep.subr.bf16.mxu0 0
        %493 = vmatpush1.bf16.msra.mxu0 0
        %494 = vmatprep.subr.bf16.mxu0 0
        %495 = vmatpush1.bf16.msra.mxu0 0
        %496 = vmatprep.subr.bf16.mxu0 0
        %497 = vmatpush1.bf16.msra.mxu0 0
        %498 = vmatprep.subr.bf16.mxu0 0
        %499 = vmatpush1.bf16.msra.mxu0 0
        %500 = vmatprep.subr.bf16.mxu0 0
        %501 = vmatpush1.bf16.msra.mxu0 0
        %502 = vmatprep.subr.bf16.mxu0 0
        %503 = vmatpush1.bf16.msra.mxu0 0
        %504 = vmatprep.subr.bf16.mxu0 0
        %505 = vmatpush1.bf16.msra.mxu0 0
        %506 = vmatprep.subr.bf16.mxu0 0
        %507 = vmatpush1.bf16.msra.mxu0 0
        %508 = vmatprep.subr.bf16.mxu0 0
        %509 = vmatpush1.bf16.msra.mxu0 0
        %510 = vmatprep.mubr.bf16.mxu0 0
        %511 = vmatmul.mubr.bf16.gmra.mrb[0].mxu0 %v451
        %v512 = vpop.f32.mrb[0].mxu0
        %v513 = vadd.f32 %v412, %v512
        %v514 = vpop.f32.mrb[0].mxu0
        %v515 = vpop.f32.mrb[0].mxu0
        %v516 = vadd.f32 %v413, %v515
        %v517 = vpop.f32.mrb[0].mxu0
        %518 = vmatprep.mubr.bf16.mxu0 0
        %519 = vmatmul.mubr.bf16.gmra.mrb[0].mxu0 %v454
        %v520 = vpop.f32.mrb[0].mxu0
        %v521 = vadd.f32 %v414, %v520
        %v522 = vpop.f32.mrb[0].mxu0
        %v523 = vpop.f32.mrb[0].mxu0
        %v524 = vadd.f32 %v415, %v523
        %v525 = vpop.f32.mrb[0].mxu0
        %526 = vmatprep.mubr.bf16.mxu0 0
        %527 = vmatmul.mubr.bf16.gmra.mrb[0].mxu0 %v457
        %v528 = vpop.f32.mrb[0].mxu0
        %v529 = vadd.f32 %v416, %v528
        %v530 = vpop.f32.mrb[0].mxu0
        %v531 = vpop.f32.mrb[0].mxu0
        %v532 = vadd.f32 %v417, %v531
        %v533 = vpop.f32.mrb[0].mxu0
        %534 = vmatprep.mubr.bf16.mxu0 0
        %535 = vmatmul.mubr.bf16.gmra.mrb[0].mxu0 %v460
        %v536 = vpop.f32.mrb[0].mxu0
        %v537 = vadd.f32 %v418, %v536
        %v538 = vpop.f32.mrb[0].mxu0
        %v539 = vpop.f32.mrb[0].mxu0
        %v540 = vadd.f32 %v419, %v539
        %v541 = vpop.f32.mrb[0].mxu0
        %542 = vmatprep.mubr.bf16.mxu0 0
        %543 = vmatmul.mubr.bf16.gmra.mrb[0].mxu0 %v463
        %v544 = vpop.f32.mrb[0].mxu0
        %v545 = vadd.f32 %v420, %v544
        %v546 = vpop.f32.mrb[0].mxu0
        %v547 = vpop.f32.mrb[0].mxu0
        %v548 = vadd.f32 %v421, %v547
        %v549 = vpop.f32.mrb[0].mxu0
        %550 = vmatprep.mubr.bf16.mxu0 0
        %551 = vmatmul.mubr.bf16.gmra.mrb[0].mxu0 %v466
        %v552 = vpop.f32.mrb[0].mxu0
        %v553 = vadd.f32 %v422, %v552
        %v554 = vpop.f32.mrb[0].mxu0
        %v555 = vpop.f32.mrb[0].mxu0
        %v556 = vadd.f32 %v423, %v555
        %v557 = vpop.f32.mrb[0].mxu0
        %558 = vmatprep.mubr.bf16.mxu0 0
        %559 = vmatmul.mubr.bf16.gmra.mrb[0].mxu0 %v469
        %v560 = vpop.f32.mrb[0].mxu0
        %v561 = vadd.f32 %v424, %v560
        %v562 = vpop.f32.mrb[0].mxu0
        %v563 = vpop.f32.mrb[0].mxu0
        %v564 = vadd.f32 %v425, %v563
        %v565 = vpop.f32.mrb[0].mxu0
        %566 = vmatprep.mubr.bf16.mxu0 0
        %567 = vmatmul.mubr.bf16.gmra.mrb[0].mxu0 %v472
        %v568 = vpop.f32.mrb[0].mxu0
        %v569 = vadd.f32 %v426, %v568
        %v570 = vpop.f32.mrb[0].mxu0
        %v571 = vpop.f32.mrb[0].mxu0
        %v572 = vadd.f32 %v427, %v571
        %v573 = vpop.f32.mrb[0].mxu0
        %574 = vdwg.mxu0
        %v575 = vmax.f32 %v513, %v529
        %v576 = vmax.f32 %v516, %v532
        %v577 = vmax.f32 %v521, %v537
        %v578 = vmax.f32 %v524, %v540
        %v579 = vmax.f32 %v575, %v545
        %v580 = vmax.f32 %v576, %v548
        %v581 = vmax.f32 %v577, %v553
        %v582 = vmax.f32 %v578, %v556
        %v583 = vmax.f32 %v579, %v561
        %v584 = vmax.f32 %v580, %v564
        %v585 = vmax.f32 %v581, %v569
        %v586 = vmax.f32 %v582, %v572
        %v587 = vmax.f32 %v583, %v584
        %v588 = vmax.f32 %v585, %v586
        %v589 = vmax.f32 %v587, %v588
        %v590 = vrot.slane %v589, 4
        %v591 = vmax.f32 %v589, %v590
        %v592 = vrot.slane %v591, 2
        %v593 = vmax.f32 %v591, %v592
        %v594 = vrot.slane %v593, 1
        %v595 = vmax.f32 %v593, %v594
        %v596 = vsub.f32 %v513, %v595
        %v597 = vsub.f32 %v516, %v595
        %v598 = vsub.f32 %v521, %v595
        %v599 = vsub.f32 %v524, %v595
        %v600 = vsub.f32 %v529, %v595
        %v601 = vsub.f32 %v532, %v595
        %v602 = vsub.f32 %v537, %v595
        %v603 = vsub.f32 %v540, %v595
        %v604 = vsub.f32 %v545, %v595
        %v605 = vsub.f32 %v548, %v595
        %v606 = vsub.f32 %v553, %v595
        %v607 = vsub.f32 %v556, %v595
        %v608 = vsub.f32 %v561, %v595
        %v609 = vsub.f32 %v564, %v595
        %v610 = vsub.f32 %v569, %v595
        %v611 = vsub.f32 %v572, %v595
        %v612 = vpack.c.bf16 %v597, %v596
        %v613 = vpack.c.bf16 %v599, %v598
        %v614 = vpack.c.bf16 %v601, %v600
        %v615 = vpack.c.bf16 %v603, %v602
        %v616 = vpack.c.bf16 %v605, %v604
        %v617 = vpack.c.bf16 %v607, %v606
        %v618 = vpack.c.bf16 %v609, %v608
        %v619 = vpack.c.bf16 %v611, %v610
        %v621 = vmul.bf16 %v612, 1069105081
        %v622 = vpow.bf16.pop %v621
        %v624 = vmul.bf16 %v613, 1069105081
        %v625 = vpow.bf16.pop %v624
        %v627 = vmul.bf16 %v614, 1069105081
        %v628 = vpow.bf16.pop %v627
        %v630 = vmul.bf16 %v615, 1069105081
        %v631 = vpow.bf16.pop %v630
        %v633 = vmul.bf16 %v616, 1069105081
        %v634 = vpow.bf16.pop %v633
        %v636 = vmul.bf16 %v617, 1069105081
        %v637 = vpow.bf16.pop %v636
        %v639 = vmul.bf16 %v618, 1069105081
        %v640 = vpow.bf16.pop %v639
        %v642 = vmul.bf16 %v619, 1069105081
        %v643 = vpow.bf16.pop %v642
        %v644 = vunpack.c.l.bf16 %v622
        %v645 = vunpack.c.h.bf16 %v622
        %v646 = vunpack.c.l.bf16 %v625
        %v647 = vunpack.c.h.bf16 %v625
        %v648 = vunpack.c.l.bf16 %v628
        %v649 = vunpack.c.h.bf16 %v628
        %v650 = vunpack.c.l.bf16 %v631
        %v651 = vunpack.c.h.bf16 %v631
        %v652 = vunpack.c.l.bf16 %v634
        %v653 = vunpack.c.h.bf16 %v634
        %v654 = vunpack.c.l.bf16 %v637
        %v655 = vunpack.c.h.bf16 %v637
        %v656 = vunpack.c.l.bf16 %v640
        %v657 = vunpack.c.h.bf16 %v640
        %v658 = vunpack.c.l.bf16 %v643
        %v659 = vunpack.c.h.bf16 %v643
        %v660 = vadd.f32 %v644, %v645
        %v661 = vadd.f32 %v660, %v646
        %v662 = vadd.f32 %v661, %v647
        %v663 = vadd.f32 %v662, %v648
        %v664 = vadd.f32 %v663, %v649
        %v665 = vadd.f32 %v664, %v650
        %v666 = vadd.f32 %v665, %v651
        %v667 = vadd.f32 %v666, %v652
        %v668 = vadd.f32 %v667, %v653
        %v669 = vadd.f32 %v668, %v654
        %v670 = vadd.f32 %v669, %v655
        %v671 = vadd.f32 %v670, %v656
        %v672 = vadd.f32 %v671, %v657
        %v673 = vadd.f32 %v672, %v658
        %v674 = vadd.f32 %v673, %v659
        %v675 = vrot.slane %v674, 4
        %v676 = vadd.f32 %v674, %v675
        %v677 = vrot.slane %v676, 2
        %v678 = vadd.f32 %v676, %v677
        %v679 = vrot.slane %v678, 1
        %v680 = vadd.f32 %v678, %v679
        %681 = vmatprep.subr.bf16.mxu0 0
        %682 = vmatpush1.bf16.msra.mxu0 %v622
        %683 = vmatprep.subr.bf16.mxu0 0
        %684 = vmatpush1.bf16.msra.mxu0 %v625
        %685 = vmatprep.subr.bf16.mxu0 0
        %686 = vmatpush1.bf16.msra.mxu0 %v628
        %687 = vmatprep.subr.bf16.mxu0 0
        %688 = vmatpush1.bf16.msra.mxu0 %v631
        %689 = vmatprep.subr.bf16.mxu0 0
        %690 = vmatpush1.bf16.msra.mxu0 %v634
        %691 = vmatprep.subr.bf16.mxu0 0
        %692 = vmatpush1.bf16.msra.mxu0 %v637
        %693 = vmatprep.subr.bf16.mxu0 0
        %694 = vmatpush1.bf16.msra.mxu0 %v640
        %695 = vmatprep.subr.bf16.mxu0 0
        %696 = vmatpush1.bf16.msra.mxu0 %v643
        %697 = vmatprep.subr.bf16.mxu0 0
        %698 = vmatpush1.bf16.msra.mxu0 0
        %699 = vmatprep.subr.bf16.mxu0 0
        %700 = vmatpush1.bf16.msra.mxu0 0
        %701 = vmatprep.subr.bf16.mxu0 0
        %702 = vmatpush1.bf16.msra.mxu0 0
        %703 = vmatprep.subr.bf16.mxu0 0
        %704 = vmatpush1.bf16.msra.mxu0 0
        %705 = vmatprep.subr.bf16.mxu0 0
        %706 = vmatpush1.bf16.msra.mxu0 0
        %707 = vmatprep.subr.bf16.mxu0 0
        %708 = vmatpush1.bf16.msra.mxu0 0
        %709 = vmatprep.subr.bf16.mxu0 0
        %710 = vmatpush1.bf16.msra.mxu0 0
        %711 = vmatprep.subr.bf16.mxu0 0
        %712 = vmatpush1.bf16.msra.mxu0 0
        %713 = vmatprep.mubr.bf16.mxu0 0
        %714 = vmatmul.mubr.bf16.gmra.mrb[0].mxu0 %v432
        %v715 = vpop.f32.mrb[0].mxu0
        %v716 = vadd.f32 0.0, %v715
        %v717 = vpop.f32.mrb[0].mxu0
        %v718 = vpop.f32.mrb[0].mxu0
        %v719 = vpop.f32.mrb[0].mxu0
        %720 = vdwg.mxu0
        %v721 = vrcp.pop %v680
        %v722 = vmul.f32 %v716, %v721
        %v723 = vpack.c.bf16 %v376, %v376
        %v724 = vld [vmem:[#allocation3 + $0x8] sm:$0xff]
        %v725 = vpack.c.bf16 %v724, %v724
        %v726 = vld [vmem:[#allocation4 + $0x8] sm:$0xff]
        %v727 = vpack.c.bf16 %v726, %v726
        %728 = vxpose.xlu0.c.b16.start [1/8] %v725, 128
        %729 = vxpose.xlu0.c.b16.cont [2/8] 0, 128
        %730 = vxpose.xlu0.c.b16.cont [3/8] 0, 128
        %731 = vxpose.xlu0.c.b16.cont [4/8] 0, 128
        %732 = vxpose.xlu0.c.b16.cont [5/8] 0, 128
        %733 = vxpose.xlu0.c.b16.cont [6/8] 0, 128
        %734 = vxpose.xlu0.c.b16.cont [7/8] 0, 128
        %735 = vxpose.xlu0.c.b16.end [8/8] 0, 128
        %v736 = vpop.trf.xlu0
        %v737 = vpop.trf.xlu0
        %v738 = vpop.trf.xlu0
        %v739 = vpop.trf.xlu0
        %v740 = vpop.trf.xlu0
        %v741 = vpop.trf.xlu0
        %v742 = vpop.trf.xlu0
        %v743 = vpop.trf.xlu0
        %v745 = vsel %vm449, %v736, 0
        %v748 = vsel %vm449, %v737, 0
        %v751 = vsel %vm449, %v738, 0
        %v754 = vsel %vm449, %v739, 0
        %v757 = vsel %vm449, %v740, 0
        %v760 = vsel %vm449, %v741, 0
        %v763 = vsel %vm449, %v742, 0
        %v766 = vsel %vm449, %v743, 0
        %v769 = vsel %vm474, %v723, 0
        %771 = vmatprep.subr.bf16.mxu0 0
        %772 = vmatpush1.bf16.msra.mxu0 %v769
        %773 = vmatprep.subr.bf16.mxu0 0
        %774 = vmatpush1.bf16.msra.mxu0 0
        %775 = vmatprep.subr.bf16.mxu0 0
        %776 = vmatpush1.bf16.msra.mxu0 0
        %777 = vmatprep.subr.bf16.mxu0 0
        %778 = vmatpush1.bf16.msra.mxu0 0
        %779 = vmatprep.subr.bf16.mxu0 0
        %780 = vmatpush1.bf16.msra.mxu0 0
        %781 = vmatprep.subr.bf16.mxu0 0
        %782 = vmatpush1.bf16.msra.mxu0 0
        %783 = vmatprep.subr.bf16.mxu0 0
        %784 = vmatpush1.bf16.msra.mxu0 0
        %785 = vmatprep.subr.bf16.mxu0 0
        %786 = vmatpush1.bf16.msra.mxu0 0
        %787 = vmatprep.subr.bf16.mxu0 0
        %788 = vmatpush1.bf16.msra.mxu0 0
        %789 = vmatprep.subr.bf16.mxu0 0
        %790 = vmatpush1.bf16.msra.mxu0 0
        %791 = vmatprep.subr.bf16.mxu0 0
        %792 = vmatpush1.bf16.msra.mxu0 0
        %793 = vmatprep.subr.bf16.mxu0 0
        %794 = vmatpush1.bf16.msra.mxu0 0
        %795 = vmatprep.subr.bf16.mxu0 0
        %796 = vmatpush1.bf16.msra.mxu0 0
        %797 = vmatprep.subr.bf16.mxu0 0
        %798 = vmatpush1.bf16.msra.mxu0 0
        %799 = vmatprep.subr.bf16.mxu0 0
        %800 = vmatpush1.bf16.msra.mxu0 0
        %801 = vmatprep.subr.bf16.mxu0 0
        %802 = vmatpush1.bf16.msra.mxu0 0
        %803 = vmatprep.mubr.bf16.mxu0 0
        %804 = vmatmul.mubr.bf16.gmra.mrb[0].mxu0 %v745
        %v805 = vpop.f32.mrb[0].mxu0
        %v806 = vadd.f32 %v412, %v805
        %v807 = vpop.f32.mrb[0].mxu0
        %v808 = vpop.f32.mrb[0].mxu0
        %v809 = vadd.f32 %v413, %v808
        %v810 = vpop.f32.mrb[0].mxu0
        %811 = vmatprep.mubr.bf16.mxu0 0
        %812 = vmatmul.mubr.bf16.gmra.mrb[0].mxu0 %v748
        %v813 = vpop.f32.mrb[0].mxu0
        %v814 = vadd.f32 %v414, %v813
        %v815 = vpop.f32.mrb[0].mxu0
        %v816 = vpop.f32.mrb[0].mxu0
        %v817 = vadd.f32 %v415, %v816
        %v818 = vpop.f32.mrb[0].mxu0
        %819 = vmatprep.mubr.bf16.mxu0 0
        %820 = vmatmul.mubr.bf16.gmra.mrb[0].mxu0 %v751
        %v821 = vpop.f32.mrb[0].mxu0
        %v822 = vadd.f32 %v416, %v821
        %v823 = vpop.f32.mrb[0].mxu0
        %v824 = vpop.f32.mrb[0].mxu0
        %v825 = vadd.f32 %v417, %v824
        %v826 = vpop.f32.mrb[0].mxu0
        %827 = vmatprep.mubr.bf16.mxu0 0
        %828 = vmatmul.mubr.bf16.gmra.mrb[0].mxu0 %v754
        %v829 = vpop.f32.mrb[0].mxu0
        %v830 = vadd.f32 %v418, %v829
        %v831 = vpop.f32.mrb[0].mxu0
        %v832 = vpop.f32.mrb[0].mxu0
        %v833 = vadd.f32 %v419, %v832
        %v834 = vpop.f32.mrb[0].mxu0
        %835 = vmatprep.mubr.bf16.mxu0 0
        %836 = vmatmul.mubr.bf16.gmra.mrb[0].mxu0 %v757
        %v837 = vpop.f32.mrb[0].mxu0
        %v838 = vadd.f32 %v420, %v837
        %v839 = vpop.f32.mrb[0].mxu0
        %v840 = vpop.f32.mrb[0].mxu0
        %v841 = vadd.f32 %v421, %v840
        %v842 = vpop.f32.mrb[0].mxu0
        %843 = vmatprep.mubr.bf16.mxu0 0
        %844 = vmatmul.mubr.bf16.gmra.mrb[0].mxu0 %v760
        %v845 = vpop.f32.mrb[0].mxu0
        %v846 = vadd.f32 %v422, %v845
        %v847 = vpop.f32.mrb[0].mxu0
        %v848 = vpop.f32.mrb[0].mxu0
        %v849 = vadd.f32 %v423, %v848
        %v850 = vpop.f32.mrb[0].mxu0
        %851 = vmatprep.mubr.bf16.mxu0 0
        %852 = vmatmul.mubr.bf16.gmra.mrb[0].mxu0 %v763
        %v853 = vpop.f32.mrb[0].mxu0
        %v854 = vadd.f32 %v424, %v853
        %v855 = vpop.f32.mrb[0].mxu0
        %v856 = vpop.f32.mrb[0].mxu0
        %v857 = vadd.f32 %v425, %v856
        %v858 = vpop.f32.mrb[0].mxu0
        %859 = vmatprep.mubr.bf16.mxu0 0
        %860 = vmatmul.mubr.bf16.gmra.mrb[0].mxu0 %v766
        %v861 = vpop.f32.mrb[0].mxu0
        %v862 = vadd.f32 %v426, %v861
        %v863 = vpop.f32.mrb[0].mxu0
        %v864 = vpop.f32.mrb[0].mxu0
        %v865 = vadd.f32 %v427, %v864
        %v866 = vpop.f32.mrb[0].mxu0
        %867 = vdwg.mxu0
        %v868 = vmax.f32 %v806, %v822
        %v869 = vmax.f32 %v809, %v825
        %v870 = vmax.f32 %v814, %v830
        %v871 = vmax.f32 %v817, %v833
        %v872 = vmax.f32 %v868, %v838
        %v873 = vmax.f32 %v869, %v841
        %v874 = vmax.f32 %v870, %v846
        %v875 = vmax.f32 %v871, %v849
        %v876 = vmax.f32 %v872, %v854
        %v877 = vmax.f32 %v873, %v857
        %v878 = vmax.f32 %v874, %v862
        %v879 = vmax.f32 %v875, %v865
        %v880 = vmax.f32 %v876, %v877
        %v881 = vmax.f32 %v878, %v879
        %v882 = vmax.f32 %v880, %v881
        %v883 = vrot.slane %v882, 4
        %v884 = vmax.f32 %v882, %v883
        %v885 = vrot.slane %v884, 2
        %v886 = vmax.f32 %v884, %v885
        %v887 = vrot.slane %v886, 1
        %v888 = vmax.f32 %v886, %v887
        %v889 = vsub.f32 %v806, %v888
        %v890 = vsub.f32 %v809, %v888
        %v891 = vsub.f32 %v814, %v888
        %v892 = vsub.f32 %v817, %v888
        %v893 = vsub.f32 %v822, %v888
        %v894 = vsub.f32 %v825, %v888
        %v895 = vsub.f32 %v830, %v888
        %v896 = vsub.f32 %v833, %v888
        %v897 = vsub.f32 %v838, %v888
        %v898 = vsub.f32 %v841, %v888
        %v899 = vsub.f32 %v846, %v888
        %v900 = vsub.f32 %v849, %v888
        %v901 = vsub.f32 %v854, %v888
        %v902 = vsub.f32 %v857, %v888
        %v903 = vsub.f32 %v862, %v888
        %v904 = vsub.f32 %v865, %v888
        %v905 = vpack.c.bf16 %v890, %v889
        %v906 = vpack.c.bf16 %v892, %v891
        %v907 = vpack.c.bf16 %v894, %v893
        %v908 = vpack.c.bf16 %v896, %v895
        %v909 = vpack.c.bf16 %v898, %v897
        %v910 = vpack.c.bf16 %v900, %v899
        %v911 = vpack.c.bf16 %v902, %v901
        %v912 = vpack.c.bf16 %v904, %v903
        %v914 = vmul.bf16 %v905, 1069105081
        %v915 = vpow.bf16.pop %v914
        %v917 = vmul.bf16 %v906, 1069105081
        %v918 = vpow.bf16.pop %v917
        %v920 = vmul.bf16 %v907, 1069105081
        %v921 = vpow.bf16.pop %v920
        %v923 = vmul.bf16 %v908, 1069105081
        %v924 = vpow.bf16.pop %v923
        %v926 = vmul.bf16 %v909, 1069105081
        %v927 = vpow.bf16.pop %v926
        %v929 = vmul.bf16 %v910, 1069105081
        %v930 = vpow.bf16.pop %v929
        %v932 = vmul.bf16 %v911, 1069105081
        %v933 = vpow.bf16.pop %v932
        %v935 = vmul.bf16 %v912, 1069105081
        %v936 = vpow.bf16.pop %v935
        %v937 = vunpack.c.l.bf16 %v915
        %v938 = vunpack.c.h.bf16 %v915
        %v939 = vunpack.c.l.bf16 %v918
        %v940 = vunpack.c.h.bf16 %v918
        %v941 = vunpack.c.l.bf16 %v921
        %v942 = vunpack.c.h.bf16 %v921
        %v943 = vunpack.c.l.bf16 %v924
        %v944 = vunpack.c.h.bf16 %v924
        %v945 = vunpack.c.l.bf16 %v927
        %v946 = vunpack.c.h.bf16 %v927
        %v947 = vunpack.c.l.bf16 %v930
        %v948 = vunpack.c.h.bf16 %v930
        %v949 = vunpack.c.l.bf16 %v933
        %v950 = vunpack.c.h.bf16 %v933
        %v951 = vunpack.c.l.bf16 %v936
        %v952 = vunpack.c.h.bf16 %v936
        %v953 = vadd.f32 %v937, %v938
        %v954 = vadd.f32 %v953, %v939
        %v955 = vadd.f32 %v954, %v940
        %v956 = vadd.f32 %v955, %v941
        %v957 = vadd.f32 %v956, %v942
        %v958 = vadd.f32 %v957, %v943
        %v959 = vadd.f32 %v958, %v944
        %v960 = vadd.f32 %v959, %v945
        %v961 = vadd.f32 %v960, %v946
        %v962 = vadd.f32 %v961, %v947
        %v963 = vadd.f32 %v962, %v948
        %v964 = vadd.f32 %v963, %v949
        %v965 = vadd.f32 %v964, %v950
        %v966 = vadd.f32 %v965, %v951
        %v967 = vadd.f32 %v966, %v952
        %v968 = vrot.slane %v967, 4
        %v969 = vadd.f32 %v967, %v968
        %v970 = vrot.slane %v969, 2
        %v971 = vadd.f32 %v969, %v970
        %v972 = vrot.slane %v971, 1
        %v973 = vadd.f32 %v971, %v972
        %974 = vmatprep.subr.bf16.mxu0 0
        %975 = vmatpush1.bf16.msra.mxu0 %v915
        %976 = vmatprep.subr.bf16.mxu0 0
        %977 = vmatpush1.bf16.msra.mxu0 %v918
        %978 = vmatprep.subr.bf16.mxu0 0
        %979 = vmatpush1.bf16.msra.mxu0 %v921
        %980 = vmatprep.subr.bf16.mxu0 0
        %981 = vmatpush1.bf16.msra.mxu0 %v924
        %982 = vmatprep.subr.bf16.mxu0 0
        %983 = vmatpush1.bf16.msra.mxu0 %v927
        %984 = vmatprep.subr.bf16.mxu0 0
        %985 = vmatpush1.bf16.msra.mxu0 %v930
        %986 = vmatprep.subr.bf16.mxu0 0
        %987 = vmatpush1.bf16.msra.mxu0 %v933
        %988 = vmatprep.subr.bf16.mxu0 0
        %989 = vmatpush1.bf16.msra.mxu0 %v936
        %990 = vmatprep.subr.bf16.mxu0 0
        %991 = vmatpush1.bf16.msra.mxu0 0
        %992 = vmatprep.subr.bf16.mxu0 0
        %993 = vmatpush1.bf16.msra.mxu0 0
        %994 = vmatprep.subr.bf16.mxu0 0
        %995 = vmatpush1.bf16.msra.mxu0 0
        %996 = vmatprep.subr.bf16.mxu0 0
        %997 = vmatpush1.bf16.msra.mxu0 0
        %998 = vmatprep.subr.bf16.mxu0 0
        %999 = vmatpush1.bf16.msra.mxu0 0
        %1000 = vmatprep.subr.bf16.mxu0 0
        %1001 = vmatpush1.bf16.msra.mxu0 0
        %1002 = vmatprep.subr.bf16.mxu0 0
        %1003 = vmatpush1.bf16.msra.mxu0 0
        %1004 = vmatprep.subr.bf16.mxu0 0
        %1005 = vmatpush1.bf16.msra.mxu0 0
        %1006 = vmatprep.mubr.bf16.mxu0 0
        %1007 = vmatmul.mubr.bf16.gmra.mrb[0].mxu0 %v727
        %v1008 = vpop.f32.mrb[0].mxu0
        %v1009 = vadd.f32 0.0, %v1008
        %v1010 = vpop.f32.mrb[0].mxu0
        %v1011 = vpop.f32.mrb[0].mxu0
        %v1012 = vpop.f32.mrb[0].mxu0
        %1013 = vdwg.mxu0
        %v1014 = vrcp.pop %v973
        %v1015 = vmul.f32 %v1009, %v1014
        %v1016 = vpack.c.bf16 %v377, %v377
        %v1017 = vld [vmem:[#allocation3 + $0x10] sm:$0xff]
        %v1018 = vpack.c.bf16 %v1017, %v1017
        %v1019 = vld [vmem:[#allocation4 + $0x10] sm:$0xff]
        %v1020 = vpack.c.bf16 %v1019, %v1019
        %1021 = vxpose.xlu0.c.b16.start [1/8] %v1018, 128
        %1022 = vxpose.xlu0.c.b16.cont [2/8] 0, 128
        %1023 = vxpose.xlu0.c.b16.cont [3/8] 0, 128
        %1024 = vxpose.xlu0.c.b16.cont [4/8] 0, 128
        %1025 = vxpose.xlu0.c.b16.cont [5/8] 0, 128
        %1026 = vxpose.xlu0.c.b16.cont [6/8] 0, 128
        %1027 = vxpose.xlu0.c.b16.cont [7/8] 0, 128
        %1028 = vxpose.xlu0.c.b16.end [8/8] 0, 128
        %v1029 = vpop.trf.xlu0
        %v1030 = vpop.trf.xlu0
        %v1031 = vpop.trf.xlu0
        %v1032 = vpop.trf.xlu0
        %v1033 = vpop.trf.xlu0
        %v1034 = vpop.trf.xlu0
        %v1035 = vpop.trf.xlu0
        %v1036 = vpop.trf.xlu0
        %v1038 = vsel %vm449, %v1029, 0
        %v1041 = vsel %vm449, %v1030, 0
        %v1044 = vsel %vm449, %v1031, 0
        %v1047 = vsel %vm449, %v1032, 0
        %v1050 = vsel %vm449, %v1033, 0
        %v1053 = vsel %vm449, %v1034, 0
        %v1056 = vsel %vm449, %v1035, 0
        %v1059 = vsel %vm449, %v1036, 0
        %v1062 = vsel %vm474, %v1016, 0
        %1064 = vmatprep.subr.bf16.mxu0 0
        %1065 = vmatpush1.bf16.msra.mxu0 %v1062
        %1066 = vmatprep.subr.bf16.mxu0 0
        %1067 = vmatpush1.bf16.msra.mxu0 0
        %1068 = vmatprep.subr.bf16.mxu0 0
        %1069 = vmatpush1.bf16.msra.mxu0 0
        %1070 = vmatprep.subr.bf16.mxu0 0
        %1071 = vmatpush1.bf16.msra.mxu0 0
        %1072 = vmatprep.subr.bf16.mxu0 0
        %1073 = vmatpush1.bf16.msra.mxu0 0
        %1074 = vmatprep.subr.bf16.mxu0 0
        %1075 = vmatpush1.bf16.msra.mxu0 0
        %1076 = vmatprep.subr.bf16.mxu0 0
        %1077 = vmatpush1.bf16.msra.mxu0 0
        %1078 = vmatprep.subr.bf16.mxu0 0
        %1079 = vmatpush1.bf16.msra.mxu0 0
        %1080 = vmatprep.subr.bf16.mxu0 0
        %1081 = vmatpush1.bf16.msra.mxu0 0
        %1082 = vmatprep.subr.bf16.mxu0 0
        %1083 = vmatpush1.bf16.msra.mxu0 0
        %1084 = vmatprep.subr.bf16.mxu0 0
        %1085 = vmatpush1.bf16.msra.mxu0 0
        %1086 = vmatprep.subr.bf16.mxu0 0
        %1087 = vmatpush1.bf16.msra.mxu0 0
        %1088 = vmatprep.subr.bf16.mxu0 0
        %1089 = vmatpush1.bf16.msra.mxu0 0
        %1090 = vmatprep.subr.bf16.mxu0 0
        %1091 = vmatpush1.bf16.msra.mxu0 0
        %1092 = vmatprep.subr.bf16.mxu0 0
        %1093 = vmatpush1.bf16.msra.mxu0 0
        %1094 = vmatprep.subr.bf16.mxu0 0
        %1095 = vmatpush1.bf16.msra.mxu0 0
        %1096 = vmatprep.mubr.bf16.mxu0 0
        %1097 = vmatmul.mubr.bf16.gmra.mrb[0].mxu0 %v1038
        %v1098 = vpop.f32.mrb[0].mxu0
        %v1099 = vadd.f32 %v412, %v1098
        %v1100 = vpop.f32.mrb[0].mxu0
        %v1101 = vpop.f32.mrb[0].mxu0
        %v1102 = vadd.f32 %v413, %v1101
        %v1103 = vpop.f32.mrb[0].mxu0
        %1104 = vmatprep.mubr.bf16.mxu0 0
        %1105 = vmatmul.mubr.bf16.gmra.mrb[0].mxu0 %v1041
        %v1106 = vpop.f32.mrb[0].mxu0
        %v1107 = vadd.f32 %v414, %v1106
        %v1108 = vpop.f32.mrb[0].mxu0
        %v1109 = vpop.f32.mrb[0].mxu0
        %v1110 = vadd.f32 %v415, %v1109
        %v1111 = vpop.f32.mrb[0].mxu0
        %1112 = vmatprep.mubr.bf16.mxu0 0
        %1113 = vmatmul.mubr.bf16.gmra.mrb[0].mxu0 %v1044
        %v1114 = vpop.f32.mrb[0].mxu0
        %v1115 = vadd.f32 %v416, %v1114
        %v1116 = vpop.f32.mrb[0].mxu0
        %v1117 = vpop.f32.mrb[0].mxu0
        %v1118 = vadd.f32 %v417, %v1117
        %v1119 = vpop.f32.mrb[0].mxu0
        %1120 = vmatprep.mubr.bf16.mxu0 0
        %1121 = vmatmul.mubr.bf16.gmra.mrb[0].mxu0 %v1047
        %v1122 = vpop.f32.mrb[0].mxu0
        %v1123 = vadd.f32 %v418, %v1122
        %v1124 = vpop.f32.mrb[0].mxu0
        %v1125 = vpop.f32.mrb[0].mxu0
        %v1126 = vadd.f32 %v419, %v1125
        %v1127 = vpop.f32.mrb[0].mxu0
        %1128 = vmatprep.mubr.bf16.mxu0 0
        %1129 = vmatmul.mubr.bf16.gmra.mrb[0].mxu0 %v1050
        %v1130 = vpop.f32.mrb[0].mxu0
        %v1131 = vadd.f32 %v420, %v1130
        %v1132 = vpop.f32.mrb[0].mxu0
        %v1133 = vpop.f32.mrb[0].mxu0
        %v1134 = vadd.f32 %v421, %v1133
        %v1135 = vpop.f32.mrb[0].mxu0
        %1136 = vmatprep.mubr.bf16.mxu0 0
        %1137 = vmatmul.mubr.bf16.gmra.mrb[0].mxu0 %v1053
        %v1138 = vpop.f32.mrb[0].mxu0
        %v1139 = vadd.f32 %v422, %v1138
        %v1140 = vpop.f32.mrb[0].mxu0
        %v1141 = vpop.f32.mrb[0].mxu0
        %v1142 = vadd.f32 %v423, %v1141
        %v1143 = vpop.f32.mrb[0].mxu0
        %1144 = vmatprep.mubr.bf16.mxu0 0
        %1145 = vmatmul.mubr.bf16.gmra.mrb[0].mxu0 %v1056
        %v1146 = vpop.f32.mrb[0].mxu0
        %v1147 = vadd.f32 %v424, %v1146
        %v1148 = vpop.f32.mrb[0].mxu0
        %v1149 = vpop.f32.mrb[0].mxu0
        %v1150 = vadd.f32 %v425, %v1149
        %v1151 = vpop.f32.mrb[0].mxu0
        %1152 = vmatprep.mubr.bf16.mxu0 0
        %1153 = vmatmul.mubr.bf16.gmra.mrb[0].mxu0 %v1059
        %v1154 = vpop.f32.mrb[0].mxu0
        %v1155 = vadd.f32 %v426, %v1154
        %v1156 = vpop.f32.mrb[0].mxu0
        %v1157 = vpop.f32.mrb[0].mxu0
        %v1158 = vadd.f32 %v427, %v1157
        %v1159 = vpop.f32.mrb[0].mxu0
        %1160 = vdwg.mxu0
        %v1161 = vmax.f32 %v1099, %v1115
        %v1162 = vmax.f32 %v1102, %v1118
        %v1163 = vmax.f32 %v1107, %v1123
        %v1164 = vmax.f32 %v1110, %v1126
        %v1165 = vmax.f32 %v1161, %v1131
        %v1166 = vmax.f32 %v1162, %v1134
        %v1167 = vmax.f32 %v1163, %v1139
        %v1168 = vmax.f32 %v1164, %v1142
        %v1169 = vmax.f32 %v1165, %v1147
        %v1170 = vmax.f32 %v1166, %v1150
        %v1171 = vmax.f32 %v1167, %v1155
        %v1172 = vmax.f32 %v1168, %v1158
        %v1173 = vmax.f32 %v1169, %v1170
        %v1174 = vmax.f32 %v1171, %v1172
        %v1175 = vmax.f32 %v1173, %v1174
        %v1176 = vrot.slane %v1175, 4
        %v1177 = vmax.f32 %v1175, %v1176
        %v1178 = vrot.slane %v1177, 2
        %v1179 = vmax.f32 %v1177, %v1178
        %v1180 = vrot.slane %v1179, 1
        %v1181 = vmax.f32 %v1179, %v1180
        %v1182 = vsub.f32 %v1099, %v1181
        %v1183 = vsub.f32 %v1102, %v1181
        %v1184 = vsub.f32 %v1107, %v1181
        %v1185 = vsub.f32 %v1110, %v1181
        %v1186 = vsub.f32 %v1115, %v1181
        %v1187 = vsub.f32 %v1118, %v1181
        %v1188 = vsub.f32 %v1123, %v1181
        %v1189 = vsub.f32 %v1126, %v1181
        %v1190 = vsub.f32 %v1131, %v1181
        %v1191 = vsub.f32 %v1134, %v1181
        %v1192 = vsub.f32 %v1139, %v1181
        %v1193 = vsub.f32 %v1142, %v1181
        %v1194 = vsub.f32 %v1147, %v1181
        %v1195 = vsub.f32 %v1150, %v1181
        %v1196 = vsub.f32 %v1155, %v1181
        %v1197 = vsub.f32 %v1158, %v1181
        %v1198 = vpack.c.bf16 %v1183, %v1182
        %v1199 = vpack.c.bf16 %v1185, %v1184
        %v1200 = vpack.c.bf16 %v1187, %v1186
        %v1201 = vpack.c.bf16 %v1189, %v1188
        %v1202 = vpack.c.bf16 %v1191, %v1190
        %v1203 = vpack.c.bf16 %v1193, %v1192
        %v1204 = vpack.c.bf16 %v1195, %v1194
        %v1205 = vpack.c.bf16 %v1197, %v1196
        %v1207 = vmul.bf16 %v1198, 1069105081
        %v1208 = vpow.bf16.pop %v1207
        %v1210 = vmul.bf16 %v1199, 1069105081
        %v1211 = vpow.bf16.pop %v1210
        %v1213 = vmul.bf16 %v1200, 1069105081
        %v1214 = vpow.bf16.pop %v1213
        %v1216 = vmul.bf16 %v1201, 1069105081
        %v1217 = vpow.bf16.pop %v1216
        %v1219 = vmul.bf16 %v1202, 1069105081
        %v1220 = vpow.bf16.pop %v1219
        %v1222 = vmul.bf16 %v1203, 1069105081
        %v1223 = vpow.bf16.pop %v1222
        %v1225 = vmul.bf16 %v1204, 1069105081
        %v1226 = vpow.bf16.pop %v1225
        %v1228 = vmul.bf16 %v1205, 1069105081
        %v1229 = vpow.bf16.pop %v1228
        %v1230 = vunpack.c.l.bf16 %v1208
        %v1231 = vunpack.c.h.bf16 %v1208
        %v1232 = vunpack.c.l.bf16 %v1211
        %v1233 = vunpack.c.h.bf16 %v1211
        %v1234 = vunpack.c.l.bf16 %v1214
        %v1235 = vunpack.c.h.bf16 %v1214
        %v1236 = vunpack.c.l.bf16 %v1217
        %v1237 = vunpack.c.h.bf16 %v1217
        %v1238 = vunpack.c.l.bf16 %v1220
        %v1239 = vunpack.c.h.bf16 %v1220
        %v1240 = vunpack.c.l.bf16 %v1223
        %v1241 = vunpack.c.h.bf16 %v1223
        %v1242 = vunpack.c.l.bf16 %v1226
        %v1243 = vunpack.c.h.bf16 %v1226
        %v1244 = vunpack.c.l.bf16 %v1229
        %v1245 = vunpack.c.h.bf16 %v1229
        %v1246 = vadd.f32 %v1230, %v1231
        %v1247 = vadd.f32 %v1246, %v1232
        %v1248 = vadd.f32 %v1247, %v1233
        %v1249 = vadd.f32 %v1248, %v1234
        %v1250 = vadd.f32 %v1249, %v1235
        %v1251 = vadd.f32 %v1250, %v1236
        %v1252 = vadd.f32 %v1251, %v1237
        %v1253 = vadd.f32 %v1252, %v1238
        %v1254 = vadd.f32 %v1253, %v1239
        %v1255 = vadd.f32 %v1254, %v1240
        %v1256 = vadd.f32 %v1255, %v1241
        %v1257 = vadd.f32 %v1256, %v1242
        %v1258 = vadd.f32 %v1257, %v1243
        %v1259 = vadd.f32 %v1258, %v1244
        %v1260 = vadd.f32 %v1259, %v1245
        %v1261 = vrot.slane %v1260, 4
        %v1262 = vadd.f32 %v1260, %v1261
        %v1263 = vrot.slane %v1262, 2
        %v1264 = vadd.f32 %v1262, %v1263
        %v1265 = vrot.slane %v1264, 1
        %v1266 = vadd.f32 %v1264, %v1265
        %1267 = vmatprep.subr.bf16.mxu0 0
        %1268 = vmatpush1.bf16.msra.mxu0 %v1208
        %1269 = vmatprep.subr.bf16.mxu0 0
        %1270 = vmatpush1.bf16.msra.mxu0 %v1211
        %1271 = vmatprep.subr.bf16.mxu0 0
        %1272 = vmatpush1.bf16.msra.mxu0 %v1214
        %1273 = vmatprep.subr.bf16.mxu0 0
        %1274 = vmatpush1.bf16.msra.mxu0 %v1217
        %1275 = vmatprep.subr.bf16.mxu0 0
        %1276 = vmatpush1.bf16.msra.mxu0 %v1220
        %1277 = vmatprep.subr.bf16.mxu0 0
        %1278 = vmatpush1.bf16.msra.mxu0 %v1223
        %1279 = vmatprep.subr.bf16.mxu0 0
        %1280 = vmatpush1.bf16.msra.mxu0 %v1226
        %1281 = vmatprep.subr.bf16.mxu0 0
        %1282 = vmatpush1.bf16.msra.mxu0 %v1229
        %1283 = vmatprep.subr.bf16.mxu0 0
        %1284 = vmatpush1.bf16.msra.mxu0 0
        %1285 = vmatprep.subr.bf16.mxu0 0
        %1286 = vmatpush1.bf16.msra.mxu0 0
        %1287 = vmatprep.subr.bf16.mxu0 0
        %1288 = vmatpush1.bf16.msra.mxu0 0
        %1289 = vmatprep.subr.bf16.mxu0 0
        %1290 = vmatpush1.bf16.msra.mxu0 0
        %1291 = vmatprep.subr.bf16.mxu0 0
        %1292 = vmatpush1.bf16.msra.mxu0 0
        %1293 = vmatprep.subr.bf16.mxu0 0
        %1294 = vmatpush1.bf16.msra.mxu0 0
        %1295 = vmatprep.subr.bf16.mxu0 0
        %1296 = vmatpush1.bf16.msra.mxu0 0
        %1297 = vmatprep.subr.bf16.mxu0 0
        %1298 = vmatpush1.bf16.msra.mxu0 0
        %1299 = vmatprep.mubr.bf16.mxu0 0
        %1300 = vmatmul.mubr.bf16.gmra.mrb[0].mxu0 %v1020
        %v1301 = vpop.f32.mrb[0].mxu0
        %v1302 = vadd.f32 0.0, %v1301
        %v1303 = vpop.f32.mrb[0].mxu0
        %v1304 = vpop.f32.mrb[0].mxu0
        %v1305 = vpop.f32.mrb[0].mxu0
        %1306 = vdwg.mxu0
        %v1307 = vrcp.pop %v1266
        %v1308 = vmul.f32 %v1302, %v1307
        %v1309 = vpack.c.bf16 %v378, %v378
        %v1310 = vld [vmem:[#allocation3 + $0x18] sm:$0xff]
        %v1311 = vpack.c.bf16 %v1310, %v1310
        %v1312 = vld [vmem:[#allocation4 + $0x18] sm:$0xff]
        %v1313 = vpack.c.bf16 %v1312, %v1312
        %1314 = vxpose.xlu0.c.b16.start [1/8] %v1311, 128
        %1315 = vxpose.xlu0.c.b16.cont [2/8] 0, 128
        %1316 = vxpose.xlu0.c.b16.cont [3/8] 0, 128
        %1317 = vxpose.xlu0.c.b16.cont [4/8] 0, 128
        %1318 = vxpose.xlu0.c.b16.cont [5/8] 0, 128
        %1319 = vxpose.xlu0.c.b16.cont [6/8] 0, 128
        %1320 = vxpose.xlu0.c.b16.cont [7/8] 0, 128
        %1321 = vxpose.xlu0.c.b16.end [8/8] 0, 128
        %v1322 = vpop.trf.xlu0
        %v1323 = vpop.trf.xlu0
        %v1324 = vpop.trf.xlu0
        %v1325 = vpop.trf.xlu0
        %v1326 = vpop.trf.xlu0
        %v1327 = vpop.trf.xlu0
        %v1328 = vpop.trf.xlu0
        %v1329 = vpop.trf.xlu0
        %v1331 = vsel %vm449, %v1322, 0
        %v1334 = vsel %vm449, %v1323, 0
        %v1337 = vsel %vm449, %v1324, 0
        %v1340 = vsel %vm449, %v1325, 0
        %v1343 = vsel %vm449, %v1326, 0
        %v1346 = vsel %vm449, %v1327, 0
        %v1349 = vsel %vm449, %v1328, 0
        %v1352 = vsel %vm449, %v1329, 0
        %v1355 = vsel %vm474, %v1309, 0
        %1357 = vmatprep.subr.bf16.mxu0 0
        %1358 = vmatpush1.bf16.msra.mxu0 %v1355
        %1359 = vmatprep.subr.bf16.mxu0 0
        %1360 = vmatpush1.bf16.msra.mxu0 0
        %1361 = vmatprep.subr.bf16.mxu0 0
        %1362 = vmatpush1.bf16.msra.mxu0 0
        %1363 = vmatprep.subr.bf16.mxu0 0
        %1364 = vmatpush1.bf16.msra.mxu0 0
        %1365 = vmatprep.subr.bf16.mxu0 0
        %1366 = vmatpush1.bf16.msra.mxu0 0
        %1367 = vmatprep.subr.bf16.mxu0 0
        %1368 = vmatpush1.bf16.msra.mxu0 0
        %1369 = vmatprep.subr.bf16.mxu0 0
        %1370 = vmatpush1.bf16.msra.mxu0 0
        %1371 = vmatprep.subr.bf16.mxu0 0
        %1372 = vmatpush1.bf16.msra.mxu0 0
        %1373 = vmatprep.subr.bf16.mxu0 0
        %1374 = vmatpush1.bf16.msra.mxu0 0
        %1375 = vmatprep.subr.bf16.mxu0 0
        %1376 = vmatpush1.bf16.msra.mxu0 0
        %1377 = vmatprep.subr.bf16.mxu0 0
        %1378 = vmatpush1.bf16.msra.mxu0 0
        %1379 = vmatprep.subr.bf16.mxu0 0
        %1380 = vmatpush1.bf16.msra.mxu0 0
        %1381 = vmatprep.subr.bf16.mxu0 0
        %1382 = vmatpush1.bf16.msra.mxu0 0
        %1383 = vmatprep.subr.bf16.mxu0 0
        %1384 = vmatpush1.bf16.msra.mxu0 0
        %1385 = vmatprep.subr.bf16.mxu0 0
        %1386 = vmatpush1.bf16.msra.mxu0 0
        %1387 = vmatprep.subr.bf16.mxu0 0
        %1388 = vmatpush1.bf16.msra.mxu0 0
        %1389 = vmatprep.mubr.bf16.mxu0 0
        %1390 = vmatmul.mubr.bf16.gmra.mrb[0].mxu0 %v1331
        %v1391 = vpop.f32.mrb[0].mxu0
        %v1392 = vadd.f32 %v412, %v1391
        %v1393 = vpop.f32.mrb[0].mxu0
        %v1394 = vpop.f32.mrb[0].mxu0
        %v1395 = vadd.f32 %v413, %v1394
        %v1396 = vpop.f32.mrb[0].mxu0
        %1397 = vmatprep.mubr.bf16.mxu0 0
        %1398 = vmatmul.mubr.bf16.gmra.mrb[0].mxu0 %v1334
        %v1399 = vpop.f32.mrb[0].mxu0
        %v1400 = vadd.f32 %v414, %v1399
        %v1401 = vpop.f32.mrb[0].mxu0
        %v1402 = vpop.f32.mrb[0].mxu0
        %v1403 = vadd.f32 %v415, %v1402
        %v1404 = vpop.f32.mrb[0].mxu0
        %1405 = vmatprep.mubr.bf16.mxu0 0
        %1406 = vmatmul.mubr.bf16.gmra.mrb[0].mxu0 %v1337
        %v1407 = vpop.f32.mrb[0].mxu0
        %v1408 = vadd.f32 %v416, %v1407
        %v1409 = vpop.f32.mrb[0].mxu0
        %v1410 = vpop.f32.mrb[0].mxu0
        %v1411 = vadd.f32 %v417, %v1410
        %v1412 = vpop.f32.mrb[0].mxu0
        %1413 = vmatprep.mubr.bf16.mxu0 0
        %1414 = vmatmul.mubr.bf16.gmra.mrb[0].mxu0 %v1340
        %v1415 = vpop.f32.mrb[0].mxu0
        %v1416 = vadd.f32 %v418, %v1415
        %v1417 = vpop.f32.mrb[0].mxu0
        %v1418 = vpop.f32.mrb[0].mxu0
        %v1419 = vadd.f32 %v419, %v1418
        %v1420 = vpop.f32.mrb[0].mxu0
        %1421 = vmatprep.mubr.bf16.mxu0 0
        %1422 = vmatmul.mubr.bf16.gmra.mrb[0].mxu0 %v1343
        %v1423 = vpop.f32.mrb[0].mxu0
        %v1424 = vadd.f32 %v420, %v1423
        %v1425 = vpop.f32.mrb[0].mxu0
        %v1426 = vpop.f32.mrb[0].mxu0
        %v1427 = vadd.f32 %v421, %v1426
        %v1428 = vpop.f32.mrb[0].mxu0
        %1429 = vmatprep.mubr.bf16.mxu0 0
        %1430 = vmatmul.mubr.bf16.gmra.mrb[0].mxu0 %v1346
        %v1431 = vpop.f32.mrb[0].mxu0
        %v1432 = vadd.f32 %v422, %v1431
        %v1433 = vpop.f32.mrb[0].mxu0
        %v1434 = vpop.f32.mrb[0].mxu0
        %v1435 = vadd.f32 %v423, %v1434
        %v1436 = vpop.f32.mrb[0].mxu0
        %1437 = vmatprep.mubr.bf16.mxu0 0
        %1438 = vmatmul.mubr.bf16.gmra.mrb[0].mxu0 %v1349
        %v1439 = vpop.f32.mrb[0].mxu0
        %v1440 = vadd.f32 %v424, %v1439
        %v1441 = vpop.f32.mrb[0].mxu0
        %v1442 = vpop.f32.mrb[0].mxu0
        %v1443 = vadd.f32 %v425, %v1442
        %v1444 = vpop.f32.mrb[0].mxu0
        %1445 = vmatprep.mubr.bf16.mxu0 0
        %1446 = vmatmul.mubr.bf16.gmra.mrb[0].mxu0 %v1352
        %v1447 = vpop.f32.mrb[0].mxu0
        %v1448 = vadd.f32 %v426, %v1447
        %v1449 = vpop.f32.mrb[0].mxu0
        %v1450 = vpop.f32.mrb[0].mxu0
        %v1451 = vadd.f32 %v427, %v1450
        %v1452 = vpop.f32.mrb[0].mxu0
        %1453 = vdwg.mxu0
        %v1454 = vmax.f32 %v1392, %v1408
        %v1455 = vmax.f32 %v1395, %v1411
        %v1456 = vmax.f32 %v1400, %v1416
        %v1457 = vmax.f32 %v1403, %v1419
        %v1458 = vmax.f32 %v1454, %v1424
        %v1459 = vmax.f32 %v1455, %v1427
        %v1460 = vmax.f32 %v1456, %v1432
        %v1461 = vmax.f32 %v1457, %v1435
        %v1462 = vmax.f32 %v1458, %v1440
        %v1463 = vmax.f32 %v1459, %v1443
        %v1464 = vmax.f32 %v1460, %v1448
        %v1465 = vmax.f32 %v1461, %v1451
        %v1466 = vmax.f32 %v1462, %v1463
        %v1467 = vmax.f32 %v1464, %v1465
        %v1468 = vmax.f32 %v1466, %v1467
        %v1469 = vrot.slane %v1468, 4
        %v1470 = vmax.f32 %v1468, %v1469
        %v1471 = vrot.slane %v1470, 2
        %v1472 = vmax.f32 %v1470, %v1471
        %v1473 = vrot.slane %v1472, 1
        %v1474 = vmax.f32 %v1472, %v1473
        %v1475 = vsub.f32 %v1392, %v1474
        %v1476 = vsub.f32 %v1395, %v1474
        %v1477 = vsub.f32 %v1400, %v1474
        %v1478 = vsub.f32 %v1403, %v1474
        %v1479 = vsub.f32 %v1408, %v1474
        %v1480 = vsub.f32 %v1411, %v1474
        %v1481 = vsub.f32 %v1416, %v1474
        %v1482 = vsub.f32 %v1419, %v1474
        %v1483 = vsub.f32 %v1424, %v1474
        %v1484 = vsub.f32 %v1427, %v1474
        %v1485 = vsub.f32 %v1432, %v1474
        %v1486 = vsub.f32 %v1435, %v1474
        %v1487 = vsub.f32 %v1440, %v1474
        %v1488 = vsub.f32 %v1443, %v1474
        %v1489 = vsub.f32 %v1448, %v1474
        %v1490 = vsub.f32 %v1451, %v1474
        %v1491 = vpack.c.bf16 %v1476, %v1475
        %v1492 = vpack.c.bf16 %v1478, %v1477
        %v1493 = vpack.c.bf16 %v1480, %v1479
        %v1494 = vpack.c.bf16 %v1482, %v1481
        %v1495 = vpack.c.bf16 %v1484, %v1483
        %v1496 = vpack.c.bf16 %v1486, %v1485
        %v1497 = vpack.c.bf16 %v1488, %v1487
        %v1498 = vpack.c.bf16 %v1490, %v1489
        %v1500 = vmul.bf16 %v1491, 1069105081
        %v1501 = vpow.bf16.pop %v1500
        %v1503 = vmul.bf16 %v1492, 1069105081
        %v1504 = vpow.bf16.pop %v1503
        %v1506 = vmul.bf16 %v1493, 1069105081
        %v1507 = vpow.bf16.pop %v1506
        %v1509 = vmul.bf16 %v1494, 1069105081
        %v1510 = vpow.bf16.pop %v1509
        %v1512 = vmul.bf16 %v1495, 1069105081
        %v1513 = vpow.bf16.pop %v1512
        %v1515 = vmul.bf16 %v1496, 1069105081
        %v1516 = vpow.bf16.pop %v1515
        %v1518 = vmul.bf16 %v1497, 1069105081
        %v1519 = vpow.bf16.pop %v1518
        %v1521 = vmul.bf16 %v1498, 1069105081
        %v1522 = vpow.bf16.pop %v1521
        %v1523 = vunpack.c.l.bf16 %v1501
        %v1524 = vunpack.c.h.bf16 %v1501
        %v1525 = vunpack.c.l.bf16 %v1504
        %v1526 = vunpack.c.h.bf16 %v1504
        %v1527 = vunpack.c.l.bf16 %v1507
        %v1528 = vunpack.c.h.bf16 %v1507
        %v1529 = vunpack.c.l.bf16 %v1510
        %v1530 = vunpack.c.h.bf16 %v1510
        %v1531 = vunpack.c.l.bf16 %v1513
        %v1532 = vunpack.c.h.bf16 %v1513
        %v1533 = vunpack.c.l.bf16 %v1516
        %v1534 = vunpack.c.h.bf16 %v1516
        %v1535 = vunpack.c.l.bf16 %v1519
        %v1536 = vunpack.c.h.bf16 %v1519
        %v1537 = vunpack.c.l.bf16 %v1522
        %v1538 = vunpack.c.h.bf16 %v1522
        %v1539 = vadd.f32 %v1523, %v1524
        %v1540 = vadd.f32 %v1539, %v1525
        %v1541 = vadd.f32 %v1540, %v1526
        %v1542 = vadd.f32 %v1541, %v1527
        %v1543 = vadd.f32 %v1542, %v1528
        %v1544 = vadd.f32 %v1543, %v1529
        %v1545 = vadd.f32 %v1544, %v1530
        %v1546 = vadd.f32 %v1545, %v1531
        %v1547 = vadd.f32 %v1546, %v1532
        %v1548 = vadd.f32 %v1547, %v1533
        %v1549 = vadd.f32 %v1548, %v1534
        %v1550 = vadd.f32 %v1549, %v1535
        %v1551 = vadd.f32 %v1550, %v1536
        %v1552 = vadd.f32 %v1551, %v1537
        %v1553 = vadd.f32 %v1552, %v1538
        %v1554 = vrot.slane %v1553, 4
        %v1555 = vadd.f32 %v1553, %v1554
        %v1556 = vrot.slane %v1555, 2
        %v1557 = vadd.f32 %v1555, %v1556
        %v1558 = vrot.slane %v1557, 1
        %v1559 = vadd.f32 %v1557, %v1558
        %1560 = vmatprep.subr.bf16.mxu0 0
        %1561 = vmatpush1.bf16.msra.mxu0 %v1501
        %1562 = vmatprep.subr.bf16.mxu0 0
        %1563 = vmatpush1.bf16.msra.mxu0 %v1504
        %1564 = vmatprep.subr.bf16.mxu0 0
        %1565 = vmatpush1.bf16.msra.mxu0 %v1507
        %1566 = vmatprep.subr.bf16.mxu0 0
        %1567 = vmatpush1.bf16.msra.mxu0 %v1510
        %1568 = vmatprep.subr.bf16.mxu0 0
        %1569 = vmatpush1.bf16.msra.mxu0 %v1513
        %1570 = vmatprep.subr.bf16.mxu0 0
        %1571 = vmatpush1.bf16.msra.mxu0 %v1516
        %1572 = vmatprep.subr.bf16.mxu0 0
        %1573 = vmatpush1.bf16.msra.mxu0 %v1519
        %1574 = vmatprep.subr.bf16.mxu0 0
        %1575 = vmatpush1.bf16.msra.mxu0 %v1522
        %1576 = vmatprep.subr.bf16.mxu0 0
        %1577 = vmatpush1.bf16.msra.mxu0 0
        %1578 = vmatprep.subr.bf16.mxu0 0
        %1579 = vmatpush1.bf16.msra.mxu0 0
        %1580 = vmatprep.subr.bf16.mxu0 0
        %1581 = vmatpush1.bf16.msra.mxu0 0
        %1582 = vmatprep.subr.bf16.mxu0 0
        %1583 = vmatpush1.bf16.msra.mxu0 0
        %1584 = vmatprep.subr.bf16.mxu0 0
        %1585 = vmatpush1.bf16.msra.mxu0 0
        %1586 = vmatprep.subr.bf16.mxu0 0
        %1587 = vmatpush1.bf16.msra.mxu0 0
        %1588 = vmatprep.subr.bf16.mxu0 0
        %1589 = vmatpush1.bf16.msra.mxu0 0
        %1590 = vmatprep.subr.bf16.mxu0 0
        %1591 = vmatpush1.bf16.msra.mxu0 0
        %1592 = vmatprep.mubr.bf16.mxu0 0
        %1593 = vmatmul.mubr.bf16.gmra.mrb[0].mxu0 %v1313
        %v1594 = vpop.f32.mrb[0].mxu0
        %v1595 = vadd.f32 0.0, %v1594
        %v1596 = vpop.f32.mrb[0].mxu0
        %v1597 = vpop.f32.mrb[0].mxu0
        %v1598 = vpop.f32.mrb[0].mxu0
        %1599 = vdwg.mxu0
        %v1600 = vrcp.pop %v1559
        %v1601 = vmul.f32 %v1595, %v1600
        %v1602 = vpack.c.bf16 %v1015, %v722
        %v1603 = vpack.c.bf16 %v1601, %v1308
        %v1604 = vld [vmem:[%s2] sm:$0xf]
        %v1605 = vld [vmem:[%s2 + $0x4] sm:$0xf]
        %v1606 = vld [vmem:[%s2 + $0x8] sm:$0xf]
        %v1607 = vld [vmem:[%s2 + $0xc] sm:$0xf]
        %v1608 = vld [vmem:[%s3] sm:$0xff]
        %v1609 = vld [vmem:[%s3 + $0x8] sm:$0xff]
        %v1610 = vld [vmem:[%s3 + $0x10] sm:$0xff]
        %v1611 = vld [vmem:[%s3 + $0x18] sm:$0xff]
        %1613 = vset.pattern.permute.xlu0 0
        %1614 = vperm.xlu0 %1613, %v1608
        %v1615 = vpop.permute.xlu0 %1614
        %1618 = vset.pattern.permute.xlu0 0
        %1619 = vperm.xlu0 %1618, %v1609
        %v1620 = vpop.permute.xlu0 %1619
        %1623 = vset.pattern.permute.xlu0 0
        %1624 = vperm.xlu0 %1623, %v1610
        %v1625 = vpop.permute.xlu0 %1624
        %1628 = vset.pattern.permute.xlu0 0
        %1629 = vperm.xlu0 %1628, %v1611
        %v1630 = vpop.permute.xlu0 %1629
        %v1636 = vunpack.c.l.b16 %v1604
        %v1637 = vunpack.c.l.b16 %v1605
        %v1638 = vunpack.c.l.b16 %v1606
        %v1639 = vunpack.c.l.b16 %v1607
        %v1640 = vpack.c.b16 %v1637, %v1636
        %v1641 = vpack.c.b16 %v1639, %v1638
        %v1643 = vsel %vm259, %v1640, 0
        %v1646 = vsel %vm259, %v1641, 0
        %1648 = vmatprep.subr.bf16.mxu0 0
        %1649 = vmatpush1.bf16.msra.mxu0 %v1602
        %1650 = vmatprep.subr.bf16.mxu0 0
        %1651 = vmatpush1.bf16.msra.mxu0 %v1603
        %1652 = vmatprep.subr.bf16.mxu0 0
        %1653 = vmatpush1.bf16.msra.mxu0 0
        %1654 = vmatprep.subr.bf16.mxu0 0
        %1655 = vmatpush1.bf16.msra.mxu0 0
        %1656 = vmatprep.subr.bf16.mxu0 0
        %1657 = vmatpush1.bf16.msra.mxu0 0
        %1658 = vmatprep.subr.bf16.mxu0 0
        %1659 = vmatpush1.bf16.msra.mxu0 0
        %1660 = vmatprep.subr.bf16.mxu0 0
        %1661 = vmatpush1.bf16.msra.mxu0 0
        %1662 = vmatprep.subr.bf16.mxu0 0
        %1663 = vmatpush1.bf16.msra.mxu0 0
        %1664 = vmatprep.subr.bf16.mxu0 0
        %1665 = vmatpush1.bf16.msra.mxu0 0
        %1666 = vmatprep.subr.bf16.mxu0 0
        %1667 = vmatpush1.bf16.msra.mxu0 0
        %1668 = vmatprep.subr.bf16.mxu0 0
        %1669 = vmatpush1.bf16.msra.mxu0 0
        %1670 = vmatprep.subr.bf16.mxu0 0
        %1671 = vmatpush1.bf16.msra.mxu0 0
        %1672 = vmatprep.subr.bf16.mxu0 0
        %1673 = vmatpush1.bf16.msra.mxu0 0
        %1674 = vmatprep.subr.bf16.mxu0 0
        %1675 = vmatpush1.bf16.msra.mxu0 0
        %1676 = vmatprep.subr.bf16.mxu0 0
        %1677 = vmatpush1.bf16.msra.mxu0 0
        %1678 = vmatprep.subr.bf16.mxu0 0
        %1679 = vmatpush1.bf16.msra.mxu0 0
        %1680 = vmatprep.mubr.bf16.mxu0 0
        %1681 = vmatmul.mubr.bf16.gmra.mrb[0].mxu0 %v1643
        %v1682 = vpop.f32.mrb[0].mxu0
        %v1683 = vadd.f32 %v1615, %v1682
        %v1684 = vpop.f32.mrb[0].mxu0
        %v1685 = vpop.f32.mrb[0].mxu0
        %v1686 = vadd.f32 %v1620, %v1685
        %v1687 = vpop.f32.mrb[0].mxu0
        %1688 = vmatprep.mubr.bf16.mxu0 0
        %1689 = vmatmul.mubr.bf16.gmra.mrb[0].mxu0 %v1646
        %v1690 = vpop.f32.mrb[0].mxu0
        %v1691 = vadd.f32 %v1625, %v1690
        %v1692 = vpop.f32.mrb[0].mxu0
        %v1693 = vpop.f32.mrb[0].mxu0
        %v1694 = vadd.f32 %v1630, %v1693
        %v1695 = vpop.f32.mrb[0].mxu0
        %1696 = vdwg.mxu0
        %1697 = vst [vmem:[%s204] sm:$0xff] %v1683
        %1698 = vst [vmem:[%s204 + $0x8] sm:$0xff] %v1686
        %1699 = vst [vmem:[%s204 + $0x10] sm:$0xff] %v1691
        %1700 = vst [vmem:[%s204 + $0x18] sm:$0xff] %v1694
        %s1701 = sand.u32 %s129, 1
        %s1702 = scalar_lea.sflag [#allocation6], %s1701
        %s1703 = sand.u32 %s129, 1
        %s1704 = smul.addr %s1703, 32
        %s1705 = scalar_lea.vmem [#allocation5], %s1704
        // Predicated region
        $region37: #{tpu_custom_call.1} parent=35 // pred_check
          %p1706 = pneg %p139
        $region38: #{tpu_custom_call.1} parent=35 // pred_check_branch
          %1708 = sbr.rel (%p1706) target = $region40
        $region39: #{tpu_custom_call.1} parent=35 // pred_region
          %s1710 = ssub.s32 512, 512
          %1711 = vsyncadd %s1702, %s1710
          %s1712 = smul.addr %s22, 4
          %s1713 = sadd.s32 %s23, %s1712
          %s1714 = smul.addr %s1713, 128
          %s1715 = scalar_lea.hbm %s4, %s1714
          %s1716 = sshll.u32 %s1705, 4
          %s1717 = int_to_ptr.vmem [resolvable:$true] %s1716
          %1722 = dma.vmem_to_hbm [thread:$0]  %s1717, 512, %s1715, %s1702, 128, 128, 8
        $region40: #{tpu_custom_call.1} parent=35 // pred_fallthru
          _
      $region36: #{tpu_custom_call.1} parent=5 // pred_fallthru
        _
      %p1723 = scmp.le.s32.totalorder 2, %s13
      // Predicated region
      $region41: #{tpu_custom_call.1} parent=5 // pred_check
        %p1724 = pneg %p1723
      $region42: #{tpu_custom_call.1} parent=5 // pred_check_branch
        %1726 = sbr.rel (%p1724) target = $region44
      $region43: #{tpu_custom_call.1} parent=5 // pred_region
        %s1727 = ssub.s32 %s13, 2
        // Predicated region
        $region45: #{tpu_custom_call.1} parent=43 // pred_check
          %p1728 = pneg %p145
        $region46: #{tpu_custom_call.1} parent=43 // pred_check_branch
          %1730 = sbr.rel (%p1728) target = $region48
        $region47: #{tpu_custom_call.1} parent=43 // pred_region
          %s1731 = sand.u32 %s130, 1
          %s1732 = scalar_lea.sflag [#allocation6], %s1731
          %s1733 = sand.u32 %s130, 1
          %s1734 = smul.addr %s1733, 32
          %s1735 = scalar_lea.vmem [#allocation5], %s1734
          %1736 = dma.done %s1732, 512
        $region48: #{tpu_custom_call.1} parent=43 // pred_fallthru
          _
      $region44: #{tpu_custom_call.1} parent=5 // pred_fallthru
        _
    $region6: #{tpu_custom_call.1} parent=1 // loop_footer
      %s17 = sadd.s32 1, %s13
    $region7: #{tpu_custom_call.1} parent=1 // loop_footer_branch
      %12 = sbr.rel target = $region3
    $region8: #{tpu_custom_call.1} parent=1 // loop_exit
      _
    %1737 = vsyncpa [#allocation6], 1
    %s1738 = scalar_lea.sflag [#allocation6], 1
    %1739 = vsyncpa %s1738, 1

</llo_original>
